<compile_context>
chip_gen: v5e
topology: v5e:2x2
jax: 0.10.0
libtpu: 0.0.40
codegen_flags: <defaults>
</compile_context>

<pallas_src>
import jax
import jax.numpy as jnp
from jax.experimental import pallas as pl
from jax.experimental.pallas import tpu as pltpu


# ------------------------- Pallas kernel -------------------------

def _double_conv_kernel(x_ref, xt_ref, xb_ref, w1_ref, s1_ref, w2_ref, s2_ref,
                        o_ref, xs_ref, mid_ref):
    # x_ref : (1, TH, W, Cin)   main input rows of this row block
    # xt_ref: (1, 2,  W, Cin)   two rows above the block (clamped fetch)
    # xb_ref: (1, 2,  W, Cin)   two rows below the block (clamped fetch)
    # w1_ref: (9*Cin,  Cmid)    conv1 weight (BN1 scale folded), kh/kw/ci flattened
    # s1_ref: (1, Cmid)         folded BN1 shift (+ conv1 bias), f32
    # w2_ref: (9*Cmid, Coutp)   conv2 weight (BN2 scale folded)
    # s2_ref: (1, Coutp)        folded BN2 shift (+ conv2 bias), f32
    # o_ref : (1, TH, W, Coutp) output row block
    # xs_ref: (TH+4, LPAD+W+1, Cin)  input slab scratch, interior at column LPAD
    # mid_ref:(TH+2, LPAD+W+1, Cmid) conv1-output slab scratch (stays in VMEM)
    TH = o_ref.shape[1]
    W = o_ref.shape[2]
    Cin = x_ref.shape[3]
    Cmid = s1_ref.shape[1]
    Coutp = o_ref.shape[3]
    LPAD = xs_ref.shape[1] - (W + 1)
    HM = TH + 2                      # conv1 output rows held for conv2 (1-row halo)
    dt = xs_ref.dtype

    r = pl.program_id(1)
    nR = pl.num_programs(1)

    # ---- stage input row block into the haloed slab (halo-only zeroing) ----
    xs_ref[:, LPAD - 1:LPAD, :] = jnp.zeros((TH + 4, 1, Cin), dt)           # left halo col
    xs_ref[:, LPAD + W:LPAD + W + 1, :] = jnp.zeros((TH + 4, 1, Cin), dt)   # right halo col
    xs_ref[2:TH + 2, LPAD:LPAD + W, :] = x_ref[0].astype(dt)                # interior rows
    xs_ref[0:2, LPAD:LPAD + W, :] = xt_ref[0].astype(dt)                    # top halo rows
    xs_ref[TH + 2:TH + 4, LPAD:LPAD + W, :] = xb_ref[0].astype(dt)          # bottom halo rows

    @pl.when(r == 0)                 # image rows -2/-1 are zero padding
    def _():
        xs_ref[0:2, LPAD:LPAD + W, :] = jnp.zeros((2, W, Cin), dt)

    @pl.when(r == nR - 1)            # image rows H/H+1 are zero padding
    def _():
        xs_ref[TH + 2:TH + 4, LPAD:LPAD + W, :] = jnp.zeros((2, W, Cin), dt)

    def conv3x3(slab, w_ref, rows, c_in):
        # slab: (rows+2, W+2, c_in) value; w_ref: (9*c_in, c_out) ref.
        # 3x3 conv as 1 (tiny channels) or 3 wide MXU dots; f32 accumulation.
        m = rows * W

        def kh_patch(kh):
            s = slab[kh:kh + rows]
            return jnp.concatenate(
                [s[:, 0:W, :], s[:, 1:W + 1, :], s[:, 2:W + 2, :]],
                axis=-1).reshape(m, 3 * c_in)

        if 9 * c_in <= 256:          # fuse all 9 taps into one K=9*Cin dot
            patch = jnp.concatenate([kh_patch(k) for k in range(3)], axis=-1)
            return jnp.dot(patch, w_ref[...], preferred_element_type=jnp.float32)

        acc = jnp.dot(kh_patch(0), w_ref[0:3 * c_in, :],
                      preferred_element_type=jnp.float32)
        for kh in (1, 2):
            acc = acc + jnp.dot(kh_patch(kh),
                                w_ref[kh * 3 * c_in:(kh + 1) * 3 * c_in, :],
                                preferred_element_type=jnp.float32)
        return acc

    # ---- conv1 + folded BN1 + ReLU -> mid slab (never leaves VMEM) ----
    acc1 = conv3x3(xs_ref[:, LPAD - 1:LPAD + W + 1, :], w1_ref, HM, Cin)
    y1 = jnp.maximum(acc1 + s1_ref[...], 0.0)                               # f32 epilogue

    mid_ref[:, LPAD - 1:LPAD, :] = jnp.zeros((HM, 1, Cmid), dt)             # left halo col
    mid_ref[:, LPAD + W:LPAD + W + 1, :] = jnp.zeros((HM, 1, Cmid), dt)     # right halo col
    mid_ref[:, LPAD:LPAD + W, :] = y1.reshape(HM, W, Cmid).astype(dt)       # aligned interior

    @pl.when(r == 0)                 # conv2 sees zero padding above image row 0
    def _():
        mid_ref[0:1, LPAD - 1:LPAD + W + 1, :] = jnp.zeros((1, W + 2, Cmid), dt)

    @pl.when(r == nR - 1)            # conv2 sees zero padding below image row H-1
    def _():
        mid_ref[HM - 1:HM, LPAD - 1:LPAD + W + 1, :] = jnp.zeros((1, W + 2, Cmid), dt)

    # ---- conv2 + folded BN2 + ReLU -> output block ----
    acc2 = conv3x3(mid_ref[:, LPAD - 1:LPAD + W + 1, :], w2_ref, TH, Cmid)
    y2 = jnp.maximum(acc2 + s2_ref[...], 0.0)                               # f32 epilogue
    o_ref[...] = y2.reshape(1, TH, W, Coutp).astype(o_ref.dtype)


# ------------------------- NHWC hot-path wrapper -------------------------

def double_conv_nhwc(x_nhwc, params, *, eps=1e-5, compute_dtype=jnp.float32):
    """Fused DoubleConv (eval-mode BN), NHWC in / NHWC out."""
    N, H, W, Cin = x_nhwc.shape
    Cmid = params["w1"].shape[0]
    Cout = params["w2"].shape[0]

    def fold(w_oihw, b, gamma, beta, mean, var):
        # BN eval: y = (conv(x)+b - mean) * gamma/sqrt(var+eps) + beta
        scale = gamma / jnp.sqrt(var + eps)                   # (Co,)
        shift = (b - mean) * scale + beta                     # (Co,)
        w_hwio = jnp.transpose(w_oihw, (2, 3, 1, 0))          # (3,3,Ci,Co)
        return w_hwio * scale[None, None, None, :], shift

    w1_eff, shift1 = fold(params["w1"], params["b1"], params["gamma1"],
                          params["beta1"], params["mean1"], params["var1"])
    w2_eff, shift2 = fold(params["w2"], params["b2"], params["gamma2"],
                          params["beta2"], params["mean2"], params["var2"])

    # Lane padding only when Cout is already >= 128 (small Cout: write true width).
    LANES = 128
    if Cout >= LANES and Cout % LANES != 0:
        Coutp = pl.cdiv(Cout, LANES) * LANES
        w2_eff = jnp.pad(w2_eff, ((0, 0), (0, 0), (0, 0), (0, Coutp - Cout)))
        shift2 = jnp.pad(shift2, ((0, Coutp - Cout),))
    else:
        Coutp = Cout

    # Flatten (kh, kw, ci) into the contraction dim so kw taps fuse into one dot.
    w1r = w1_eff.reshape(9 * Cin, Cmid).astype(compute_dtype)
    w2r = w2_eff.reshape(9 * Cmid, Coutp).astype(compute_dtype)
    shift1 = shift1.reshape(1, Cmid).astype(jnp.float32)
    shift2 = shift2.reshape(1, Coutp).astype(jnp.float32)

    x_c = x_nhwc.astype(compute_dtype)
    cdt_size = jnp.dtype(compute_dtype).itemsize
    io_size = jnp.dtype(x_nhwc.dtype).itemsize
    LPAD = 32 // cdt_size            # sublane-aligned interior (8 for f32, 16 for bf16)

    # Per-generation VMEM budget (v7x: 64 MiB physical; v5e/v6e: 128 MiB).
    try:
        vmem_phys = pltpu.get_tpu_info().vmem_capacity_bytes
    except Exception:
        vmem_phys = 64 * 1024 * 1024                          # v7x-safe fallback
    vmem_limit = int(max(32 * 1024 * 1024,
                         min(vmem_phys * 0.8, 110 * 1024 * 1024)))

    def est(th):                     # rough per-step VMEM estimate for row block th
        slab_w = LPAD + W + 1
        hm = th + 2
        b = (th + 4) * slab_w * Cin * cdt_size                # input slab scratch
        b += hm * slab_w * Cmid * cdt_size                    # mid scratch
        b += hm * W * 3 * Cin * cdt_size + hm * W * Cmid * 4  # conv1 patch + f32 acc
        b += th * W * 3 * Cmid * cdt_size + th * W * Coutp * 4  # conv2 patch + f32 acc
        b += 2 * ((th + 4) * W * Cin * cdt_size + th * W * Coutp * io_size)  # pipelined IO
        b += (9 * Cin * Cmid + 9 * Cmid * Coutp + Cmid + Coutp) * cdt_size   # weights
        return b

    # Largest even divisor of H that fits the budget; prefer >=2 row blocks so both
    # v7x TensorCores get work even at batch 1.
    divs = [d for d in range(H, 0, -1) if H % d == 0 and (d % 2 == 0 or d == H)]
    prefer = [d for d in divs if d < H] if H >= 16 else []
    TH = next((d for d in prefer + divs if est(d) <= vmem_limit // 2), divs[-1])
    R = H // TH
    NHB = (H + 1) // 2               # number of 2-row halo blocks along H
    hw2 = TH // 2

    grid = (N, R)
    weight_spec = pl.BlockSpec(memory_space=pltpu.MemorySpace.VMEM)  # whole array, no 2x buffering

    flops = 2 * N * H * W * 9 * (Cin * Cmid + Cmid * Coutp)
    bytes_accessed = (N * H * W * Cin * cdt_size
                      + (9 * Cin * Cmid + 9 * Cmid * Coutp) * cdt_size
                      + (Cmid + Coutp) * 4
                      + N * H * W * Coutp * io_size)

    out = pl.pallas_call(
        _double_conv_kernel,
        out_shape=jax.ShapeDtypeStruct((N, H, W, Coutp), x_nhwc.dtype),
        grid=grid,
        in_specs=[
            pl.BlockSpec((1, TH, W, Cin), lambda n, r: (n, r, 0, 0)),
            pl.BlockSpec((1, 2, W, Cin),
                         lambda n, r: (n, jnp.maximum(r * hw2 - 1, 0), 0, 0)),
            pl.BlockSpec((1, 2, W, Cin),
                         lambda n, r: (n, jnp.minimum((r + 1) * hw2, NHB - 1), 0, 0)),
            weight_spec,   # w1
            weight_spec,   # shift1
            weight_spec,   # w2
            weight_spec,   # shift2
        ],
        out_specs=pl.BlockSpec((1, TH, W, Coutp), lambda n, r: (n, r, 0, 0)),
        scratch_shapes=[
            pltpu.VMEM((TH + 4, LPAD + W + 1, Cin), compute_dtype),
            pltpu.VMEM((TH + 2, LPAD + W + 1, Cmid), compute_dtype),
        ],
        compiler_params=pltpu.CompilerParams(
            dimension_semantics=("parallel", "parallel"),
            vmem_limit_bytes=vmem_limit,
        ),
        cost_estimate=pl.CostEstimate(flops=flops, transcendentals=0,
                                      bytes_accessed=bytes_accessed),
    )(x_c, x_c, x_c, w1r, shift1, w2r, shift2)

    return out if Coutp == Cout else out[..., :Cout]


# ------------------------- module-boundary wrapper (NCHW) -------------------------

def double_conv(x_nchw, params):
    x = jnp.transpose(x_nchw, (0, 2, 3, 1))   # one-time NCHW -> NHWC at boundary
    y = double_conv_nhwc(x, params)
    return jnp.transpose(y, (0, 3, 1, 2))     # NHWC -> NCHW


# ------------------------- pure-JAX reference -------------------------

def double_conv_ref(x_nchw, params, eps=1e-5):
    def step(x, w, b, g, bt, m, v):
        y = jax.lax.conv_general_dilated(
            x, w, window_strides=(1, 1), padding=((1, 1), (1, 1)),
            dimension_numbers=("NCHW", "OIHW", "NCHW"))
        y = y + b[None, :, None, None]
        y = (y - m[None, :, None, None]) / jnp.sqrt(v[None, :, None, None] + eps)
        y = y * g[None, :, None, None] + bt[None, :, None, None]
        return jnp.maximum(y, 0.0)

    y = step(x_nchw, params["w1"], params["b1"], params["gamma1"],
             params["beta1"], params["mean1"], params["var1"])
    y = step(y, params["w2"], params["b2"], params["gamma2"],
             params["beta2"], params["mean2"], params["var2"])
    return y


# ------------------------- main -------------------------

if __name__ == "__main__":
    key = jax.random.PRNGKey(0)
    N, Cin, H, W = 2, 4, 16, 16
    Cout = 8

    ks = jax.random.split(key, 12)
    x = jax.random.normal(ks[0], (N, Cin, H, W), jnp.float32)

    params = dict(
        # conv1: (Cout, Cin, 3, 3) + bias
        w1=0.1 * jax.random.normal(ks[1], (Cout, Cin, 3, 3), jnp.float32),
        b1=0.05 * jax.random.normal(ks[2], (Cout,), jnp.float32),
        gamma1=1.0 + 0.1 * jax.random.normal(ks[3], (Cout,), jnp.float32),
        beta1=0.1 * jax.random.normal(ks[4], (Cout,), jnp.float32),
        mean1=0.1 * jax.random.normal(ks[5], (Cout,), jnp.float32),
        var1=0.5 + jax.random.uniform(ks[6], (Cout,), jnp.float32),
        # conv2: (Cout, Cout, 3, 3) + bias
        w2=0.1 * jax.random.normal(ks[7], (Cout, Cout, 3, 3), jnp.float32),
        b2=0.05 * jax.random.normal(ks[8], (Cout,), jnp.float32),
        gamma2=1.0 + 0.1 * jax.random.normal(ks[9], (Cout,), jnp.float32),
        beta2=0.1 * jax.random.normal(ks[10], (Cout,), jnp.float32),
        mean2=0.1 * jax.random.normal(ks[11], (Cout,), jnp.float32),
        var2=0.5 + jax.random.uniform(ks[0], (Cout,), jnp.float32),
    )

    out = jax.jit(double_conv)(x, params)
    out = jax.block_until_ready(out)

    ref = double_conv_ref(x, params)
    assert out.shape == (N, Cout, H, W), out.shape
    assert jnp.allclose(out, ref, atol=1e-4, rtol=1e-4), "mismatch vs reference"

    print("KERNEL_OK")
</pallas_src>

<mosaic_0001>
module attributes {stable_mosaic.version = 11 : i64} {
  func.func @_double_conv_kernel(%arg0: i32, %arg1: i32, %arg2: memref<1x8x16x4xf32, #tpu.memory_space<vmem>>, %arg3: memref<1x2x16x4xf32, #tpu.memory_space<vmem>>, %arg4: memref<1x2x16x4xf32, #tpu.memory_space<vmem>>, %arg5: memref<36x8xf32, #tpu.memory_space<vmem>>, %arg6: memref<1x8xf32, #tpu.memory_space<vmem>>, %arg7: memref<72x8xf32, #tpu.memory_space<vmem>>, %arg8: memref<1x8xf32, #tpu.memory_space<vmem>>, %arg9: memref<1x8x16x8xf32, #tpu.memory_space<vmem>>, %arg10: memref<12x25x4xf32, #tpu.memory_space<vmem>>, %arg11: memref<10x25x8xf32, #tpu.memory_space<vmem>>) attributes {dimension_semantics = [#tpu.dimension_semantics<parallel>, #tpu.dimension_semantics<parallel>], iteration_bounds = array<i64: 2, 2>, scalar_prefetch = 0 : i64, scratch_operands = 2 : i64, tpu.core_type = #tpu.core_type<tc>, window_params = [{transform_indices = @transform_0, window_bounds = array<i64: 1, 8, 16, 4>}, {transform_indices = @transform_1, window_bounds = array<i64: 1, 2, 16, 4>}, {transform_indices = @transform_2, window_bounds = array<i64: 1, 2, 16, 4>}, {pipeline_mode = #tpu.pipeline_mode<synchronous>, transform_indices = @transform_3, window_bounds = array<i64: 36, 8>}, {pipeline_mode = #tpu.pipeline_mode<synchronous>, transform_indices = @transform_4, window_bounds = array<i64: 1, 8>}, {pipeline_mode = #tpu.pipeline_mode<synchronous>, transform_indices = @transform_5, window_bounds = array<i64: 72, 8>}, {pipeline_mode = #tpu.pipeline_mode<synchronous>, transform_indices = @transform_6, window_bounds = array<i64: 1, 8>}, {transform_indices = @transform_7, window_bounds = array<i64: 1, 8, 16, 8>}]} {
    %cst = arith.constant 0.000000e+00 : f32
    %0 = vector.broadcast %cst : f32 to vector<12x1x4xf32>
    %c0 = arith.constant 0 : index
    %c7 = arith.constant 7 : index
    %c0_0 = arith.constant 0 : index
    %1 = vector.load %arg10[%c0, %c7, %c0_0] : memref<12x25x4xf32, #tpu.memory_space<vmem>>, vector<12x1x4xf32>
    tpu.vector_store %arg10[%c0, %c7, %c0_0], %0 {strides = array<i32>} : memref<12x25x4xf32, #tpu.memory_space<vmem>>, vector<12x1x4xf32>,
    %cst_1 = arith.constant 0.000000e+00 : f32
    %2 = vector.broadcast %cst_1 : f32 to vector<12x1x4xf32>
    %c0_2 = arith.constant 0 : index
    %c24 = arith.constant 24 : index
    %c0_3 = arith.constant 0 : index
    %3 = vector.load %arg10[%c0_2, %c24, %c0_3] : memref<12x25x4xf32, #tpu.memory_space<vmem>>, vector<12x1x4xf32>
    tpu.vector_store %arg10[%c0_2, %c24, %c0_3], %2 {strides = array<i32>} : memref<12x25x4xf32, #tpu.memory_space<vmem>>, vector<12x1x4xf32>,
    %c0_4 = arith.constant 0 : index
    %c0_5 = arith.constant 0 : index
    %c0_6 = arith.constant 0 : index
    %c0_7 = arith.constant 0 : index
    %4 = vector.load %arg2[%c0_4, %c0_5, %c0_6, %c0_7] : memref<1x8x16x4xf32, #tpu.memory_space<vmem>>, vector<1x8x16x4xf32>
    %5 = vector.shape_cast %4 : vector<1x8x16x4xf32> to vector<8x16x4xf32>
    %c2 = arith.constant 2 : index
    %c8 = arith.constant 8 : index
    %c0_8 = arith.constant 0 : index
    %6 = vector.load %arg10[%c2, %c8, %c0_8] : memref<12x25x4xf32, #tpu.memory_space<vmem>>, vector<8x16x4xf32>
    tpu.vector_store %arg10[%c2, %c8, %c0_8], %5 {strides = array<i32>} : memref<12x25x4xf32, #tpu.memory_space<vmem>>, vector<8x16x4xf32>,
    %c0_9 = arith.constant 0 : index
    %c0_10 = arith.constant 0 : index
    %c0_11 = arith.constant 0 : index
    %c0_12 = arith.constant 0 : index
    %7 = vector.load %arg3[%c0_9, %c0_10, %c0_11, %c0_12] : memref<1x2x16x4xf32, #tpu.memory_space<vmem>>, vector<1x2x16x4xf32>
    %8 = vector.shape_cast %7 : vector<1x2x16x4xf32> to vector<2x16x4xf32>
    %c0_13 = arith.constant 0 : index
    %c8_14 = arith.constant 8 : index
    %c0_15 = arith.constant 0 : index
    %9 = vector.load %arg10[%c0_13, %c8_14, %c0_15] : memref<12x25x4xf32, #tpu.memory_space<vmem>>, vector<2x16x4xf32>
    tpu.vector_store %arg10[%c0_13, %c8_14, %c0_15], %8 {strides = array<i32>} : memref<12x25x4xf32, #tpu.memory_space<vmem>>, vector<2x16x4xf32>,
    %c0_16 = arith.constant 0 : index
    %c0_17 = arith.constant 0 : index
    %c0_18 = arith.constant 0 : index
    %c0_19 = arith.constant 0 : index
    %10 = vector.load %arg4[%c0_16, %c0_17, %c0_18, %c0_19] : memref<1x2x16x4xf32, #tpu.memory_space<vmem>>, vector<1x2x16x4xf32>
    %11 = vector.shape_cast %10 : vector<1x2x16x4xf32> to vector<2x16x4xf32>
    %c10 = arith.constant 10 : index
    %c8_20 = arith.constant 8 : index
    %c0_21 = arith.constant 0 : index
    %12 = vector.load %arg10[%c10, %c8_20, %c0_21] : memref<12x25x4xf32, #tpu.memory_space<vmem>>, vector<2x16x4xf32>
    tpu.vector_store %arg10[%c10, %c8_20, %c0_21], %11 {strides = array<i32>} : memref<12x25x4xf32, #tpu.memory_space<vmem>>, vector<2x16x4xf32>,
    %c0_i32 = arith.constant 0 : i32
    %13 = arith.cmpi eq, %arg1, %c0_i32 : i32
    %14 = arith.extui %13 : i1 to i32
    %c0_i32_22 = arith.constant 0 : i32
    %15 = arith.cmpi ne, %14, %c0_i32_22 : i32
    scf.if %15 {
      %cst_61 = arith.constant 0.000000e+00 : f32
      %87 = vector.broadcast %cst_61 : f32 to vector<2x16x4xf32>
      %c0_62 = arith.constant 0 : index
      %c8_63 = arith.constant 8 : index
      %c0_64 = arith.constant 0 : index
      %88 = vector.load %arg10[%c0_62, %c8_63, %c0_64] : memref<12x25x4xf32, #tpu.memory_space<vmem>>, vector<2x16x4xf32>
      tpu.vector_store %arg10[%c0_62, %c8_63, %c0_64], %87 {strides = array<i32>} : memref<12x25x4xf32, #tpu.memory_space<vmem>>, vector<2x16x4xf32>,
    } else {
    }
    %c1_i32 = arith.constant 1 : i32
    %16 = arith.cmpi eq, %arg1, %c1_i32 : i32
    %17 = arith.extui %16 : i1 to i32
    %c0_i32_23 = arith.constant 0 : i32
    %18 = arith.cmpi ne, %17, %c0_i32_23 : i32
    scf.if %18 {
      %cst_61 = arith.constant 0.000000e+00 : f32
      %87 = vector.broadcast %cst_61 : f32 to vector<2x16x4xf32>
      %c10_62 = arith.constant 10 : index
      %c8_63 = arith.constant 8 : index
      %c0_64 = arith.constant 0 : index
      %88 = vector.load %arg10[%c10_62, %c8_63, %c0_64] : memref<12x25x4xf32, #tpu.memory_space<vmem>>, vector<2x16x4xf32>
      tpu.vector_store %arg10[%c10_62, %c8_63, %c0_64], %87 {strides = array<i32>} : memref<12x25x4xf32, #tpu.memory_space<vmem>>, vector<2x16x4xf32>,
    } else {
    }
    %c0_24 = arith.constant 0 : index
    %c7_25 = arith.constant 7 : index
    %c0_26 = arith.constant 0 : index
    %19 = vector.load %arg10[%c0_24, %c7_25, %c0_26] : memref<12x25x4xf32, #tpu.memory_space<vmem>>, vector<12x18x4xf32>
    %20 = vector.extract_strided_slice %19 {offsets = [0, 0, 0], sizes = [10, 18, 4], strides = [1, 1, 1]} : vector<12x18x4xf32> to vector<10x18x4xf32>
    %21 = vector.extract_strided_slice %20 {offsets = [0, 0, 0], sizes = [10, 16, 4], strides = [1, 1, 1]} : vector<10x18x4xf32> to vector<10x16x4xf32>
    %22 = vector.extract_strided_slice %20 {offsets = [0, 1, 0], sizes = [10, 16, 4], strides = [1, 1, 1]} : vector<10x18x4xf32> to vector<10x16x4xf32>
    %23 = vector.extract_strided_slice %20 {offsets = [0, 2, 0], sizes = [10, 16, 4], strides = [1, 1, 1]} : vector<10x18x4xf32> to vector<10x16x4xf32>
    %24 = tpu.concatenate %21, %22, %23 in 2 : vector<10x16x4xf32>, vector<10x16x4xf32>, vector<10x16x4xf32> -> vector<10x16x12xf32>
    %25 = vector.shape_cast %24 : vector<10x16x12xf32> to vector<160x12xf32>
    %26 = vector.extract_strided_slice %19 {offsets = [1, 0, 0], sizes = [10, 18, 4], strides = [1, 1, 1]} : vector<12x18x4xf32> to vector<10x18x4xf32>
    %27 = vector.extract_strided_slice %26 {offsets = [0, 0, 0], sizes = [10, 16, 4], strides = [1, 1, 1]} : vector<10x18x4xf32> to vector<10x16x4xf32>
    %28 = vector.extract_strided_slice %26 {offsets = [0, 1, 0], sizes = [10, 16, 4], strides = [1, 1, 1]} : vector<10x18x4xf32> to vector<10x16x4xf32>
    %29 = vector.extract_strided_slice %26 {offsets = [0, 2, 0], sizes = [10, 16, 4], strides = [1, 1, 1]} : vector<10x18x4xf32> to vector<10x16x4xf32>
    %30 = tpu.concatenate %27, %28, %29 in 2 : vector<10x16x4xf32>, vector<10x16x4xf32>, vector<10x16x4xf32> -> vector<10x16x12xf32>
    %31 = vector.shape_cast %30 : vector<10x16x12xf32> to vector<160x12xf32>
    %32 = vector.extract_strided_slice %19 {offsets = [2, 0, 0], sizes = [10, 18, 4], strides = [1, 1, 1]} : vector<12x18x4xf32> to vector<10x18x4xf32>
    %33 = vector.extract_strided_slice %32 {offsets = [0, 0, 0], sizes = [10, 16, 4], strides = [1, 1, 1]} : vector<10x18x4xf32> to vector<10x16x4xf32>
    %34 = vector.extract_strided_slice %32 {offsets = [0, 1, 0], sizes = [10, 16, 4], strides = [1, 1, 1]} : vector<10x18x4xf32> to vector<10x16x4xf32>
    %35 = vector.extract_strided_slice %32 {offsets = [0, 2, 0], sizes = [10, 16, 4], strides = [1, 1, 1]} : vector<10x18x4xf32> to vector<10x16x4xf32>
    %36 = tpu.concatenate %33, %34, %35 in 2 : vector<10x16x4xf32>, vector<10x16x4xf32>, vector<10x16x4xf32> -> vector<10x16x12xf32>
    %37 = vector.shape_cast %36 : vector<10x16x12xf32> to vector<160x12xf32>
    %38 = tpu.concatenate %25, %31, %37 in 1 : vector<160x12xf32>, vector<160x12xf32>, vector<160x12xf32> -> vector<160x36xf32>
    %c0_27 = arith.constant 0 : index
    %c0_28 = arith.constant 0 : index
    %39 = vector.load %arg5[%c0_27, %c0_28] : memref<36x8xf32, #tpu.memory_space<vmem>>, vector<36x8xf32>
    %cst_29 = arith.constant dense<0.000000e+00> : vector<160x8xf32>
    %40 = tpu.matmul %38, %39, %cst_29 {dimension_numbers = #tpu.dot_dimension_numbers<[1], [0], [0], [1], [0, 0, 1, 1], [], []>} : vector<160x36xf32>, vector<36x8xf32>, vector<160x8xf32> -> vector<160x8xf32>
    %c0_30 = arith.constant 0 : index
    %c0_31 = arith.constant 0 : index
    %41 = vector.load %arg6[%c0_30, %c0_31] : memref<1x8xf32, #tpu.memory_space<vmem>>, vector<1x8xf32>
    %42 = vector.broadcast %41 : vector<1x8xf32> to vector<160x8xf32>
    %43 = arith.addf %40, %42 : vector<160x8xf32>
    %cst_32 = arith.constant 0.000000e+00 : f32
    %44 = vector.broadcast %cst_32 : f32 to vector<160x8xf32>
    %45 = arith.maximumf %43, %44 : vector<160x8xf32>
    %cst_33 = arith.constant 0.000000e+00 : f32
    %46 = vector.broadcast %cst_33 : f32 to vector<10x1x8xf32>
    %c0_34 = arith.constant 0 : index
    %c7_35 = arith.constant 7 : index
    %c0_36 = arith.constant 0 : index
    %47 = vector.load %arg11[%c0_34, %c7_35, %c0_36] : memref<10x25x8xf32, #tpu.memory_space<vmem>>, vector<10x1x8xf32>
    tpu.vector_store %arg11[%c0_34, %c7_35, %c0_36], %46 {strides = array<i32>} : memref<10x25x8xf32, #tpu.memory_space<vmem>>, vector<10x1x8xf32>,
    %cst_37 = arith.constant 0.000000e+00 : f32
    %48 = vector.broadcast %cst_37 : f32 to vector<10x1x8xf32>
    %c0_38 = arith.constant 0 : index
    %c24_39 = arith.constant 24 : index
    %c0_40 = arith.constant 0 : index
    %49 = vector.load %arg11[%c0_38, %c24_39, %c0_40] : memref<10x25x8xf32, #tpu.memory_space<vmem>>, vector<10x1x8xf32>
    tpu.vector_store %arg11[%c0_38, %c24_39, %c0_40], %48 {strides = array<i32>} : memref<10x25x8xf32, #tpu.memory_space<vmem>>, vector<10x1x8xf32>,
    %50 = vector.shape_cast %45 : vector<160x8xf32> to vector<10x16x8xf32>
    %c0_41 = arith.constant 0 : index
    %c8_42 = arith.constant 8 : index
    %c0_43 = arith.constant 0 : index
    %51 = vector.load %arg11[%c0_41, %c8_42, %c0_43] : memref<10x25x8xf32, #tpu.memory_space<vmem>>, vector<10x16x8xf32>
    tpu.vector_store %arg11[%c0_41, %c8_42, %c0_43], %50 {strides = array<i32>} : memref<10x25x8xf32, #tpu.memory_space<vmem>>, vector<10x16x8xf32>,
    %c0_i32_44 = arith.constant 0 : i32
    %52 = arith.cmpi eq, %arg1, %c0_i32_44 : i32
    %53 = arith.extui %52 : i1 to i32
    %c0_i32_45 = arith.constant 0 : i32
    %54 = arith.cmpi ne, %53, %c0_i32_45 : i32
    scf.if %54 {
      %cst_61 = arith.constant 0.000000e+00 : f32
      %87 = vector.broadcast %cst_61 : f32 to vector<1x18x8xf32>
      %c0_62 = arith.constant 0 : index
      %c7_63 = arith.constant 7 : index
      %c0_64 = arith.constant 0 : index
      %88 = vector.load %arg11[%c0_62, %c7_63, %c0_64] : memref<10x25x8xf32, #tpu.memory_space<vmem>>, vector<1x18x8xf32>
      tpu.vector_store %arg11[%c0_62, %c7_63, %c0_64], %87 {strides = array<i32>} : memref<10x25x8xf32, #tpu.memory_space<vmem>>, vector<1x18x8xf32>,
    } else {
    }
    %c1_i32_46 = arith.constant 1 : i32
    %55 = arith.cmpi eq, %arg1, %c1_i32_46 : i32
    %56 = arith.extui %55 : i1 to i32
    %c0_i32_47 = arith.constant 0 : i32
    %57 = arith.cmpi ne, %56, %c0_i32_47 : i32
    scf.if %57 {
      %cst_61 = arith.constant 0.000000e+00 : f32
      %87 = vector.broadcast %cst_61 : f32 to vector<1x18x8xf32>
      %c9 = arith.constant 9 : index
      %c7_62 = arith.constant 7 : index
      %c0_63 = arith.constant 0 : index
      %88 = vector.load %arg11[%c9, %c7_62, %c0_63] : memref<10x25x8xf32, #tpu.memory_space<vmem>>, vector<1x18x8xf32>
      tpu.vector_store %arg11[%c9, %c7_62, %c0_63], %87 {strides = array<i32>} : memref<10x25x8xf32, #tpu.memory_space<vmem>>, vector<1x18x8xf32>,
    } else {
    }
    %c0_48 = arith.constant 0 : index
    %c7_49 = arith.constant 7 : index
    %c0_50 = arith.constant 0 : index
    %58 = vector.load %arg11[%c0_48, %c7_49, %c0_50] : memref<10x25x8xf32, #tpu.memory_space<vmem>>, vector<10x18x8xf32>
    %59 = vector.extract_strided_slice %58 {offsets = [0, 0, 0], sizes = [8, 18, 8], strides = [1, 1, 1]} : vector<10x18x8xf32> to vector<8x18x8xf32>
    %60 = vector.extract_strided_slice %59 {offsets = [0, 0, 0], sizes = [8, 16, 8], strides = [1, 1, 1]} : vector<8x18x8xf32> to vector<8x16x8xf32>
    %61 = vector.extract_strided_slice %59 {offsets = [0, 1, 0], sizes = [8, 16, 8], strides = [1, 1, 1]} : vector<8x18x8xf32> to vector<8x16x8xf32>
    %62 = vector.extract_strided_slice %59 {offsets = [0, 2, 0], sizes = [8, 16, 8], strides = [1, 1, 1]} : vector<8x18x8xf32> to vector<8x16x8xf32>
    %63 = tpu.concatenate %60, %61, %62 in 2 : vector<8x16x8xf32>, vector<8x16x8xf32>, vector<8x16x8xf32> -> vector<8x16x24xf32>
    %64 = vector.shape_cast %63 : vector<8x16x24xf32> to vector<128x24xf32>
    %65 = vector.extract_strided_slice %58 {offsets = [1, 0, 0], sizes = [8, 18, 8], strides = [1, 1, 1]} : vector<10x18x8xf32> to vector<8x18x8xf32>
    %66 = vector.extract_strided_slice %65 {offsets = [0, 0, 0], sizes = [8, 16, 8], strides = [1, 1, 1]} : vector<8x18x8xf32> to vector<8x16x8xf32>
    %67 = vector.extract_strided_slice %65 {offsets = [0, 1, 0], sizes = [8, 16, 8], strides = [1, 1, 1]} : vector<8x18x8xf32> to vector<8x16x8xf32>
    %68 = vector.extract_strided_slice %65 {offsets = [0, 2, 0], sizes = [8, 16, 8], strides = [1, 1, 1]} : vector<8x18x8xf32> to vector<8x16x8xf32>
    %69 = tpu.concatenate %66, %67, %68 in 2 : vector<8x16x8xf32>, vector<8x16x8xf32>, vector<8x16x8xf32> -> vector<8x16x24xf32>
    %70 = vector.shape_cast %69 : vector<8x16x24xf32> to vector<128x24xf32>
    %71 = vector.extract_strided_slice %58 {offsets = [2, 0, 0], sizes = [8, 18, 8], strides = [1, 1, 1]} : vector<10x18x8xf32> to vector<8x18x8xf32>
    %72 = vector.extract_strided_slice %71 {offsets = [0, 0, 0], sizes = [8, 16, 8], strides = [1, 1, 1]} : vector<8x18x8xf32> to vector<8x16x8xf32>
    %73 = vector.extract_strided_slice %71 {offsets = [0, 1, 0], sizes = [8, 16, 8], strides = [1, 1, 1]} : vector<8x18x8xf32> to vector<8x16x8xf32>
    %74 = vector.extract_strided_slice %71 {offsets = [0, 2, 0], sizes = [8, 16, 8], strides = [1, 1, 1]} : vector<8x18x8xf32> to vector<8x16x8xf32>
    %75 = tpu.concatenate %72, %73, %74 in 2 : vector<8x16x8xf32>, vector<8x16x8xf32>, vector<8x16x8xf32> -> vector<8x16x24xf32>
    %76 = vector.shape_cast %75 : vector<8x16x24xf32> to vector<128x24xf32>
    %77 = tpu.concatenate %64, %70, %76 in 1 : vector<128x24xf32>, vector<128x24xf32>, vector<128x24xf32> -> vector<128x72xf32>
    %c0_51 = arith.constant 0 : index
    %c0_52 = arith.constant 0 : index
    %78 = vector.load %arg7[%c0_51, %c0_52] : memref<72x8xf32, #tpu.memory_space<vmem>>, vector<72x8xf32>
    %cst_53 = arith.constant dense<0.000000e+00> : vector<128x8xf32>
    %79 = tpu.matmul %77, %78, %cst_53 {dimension_numbers = #tpu.dot_dimension_numbers<[1], [0], [0], [1], [0, 0, 1, 1], [], []>} : vector<128x72xf32>, vector<72x8xf32>, vector<128x8xf32> -> vector<128x8xf32>
    %c0_54 = arith.constant 0 : index
    %c0_55 = arith.constant 0 : index
    %80 = vector.load %arg8[%c0_54, %c0_55] : memref<1x8xf32, #tpu.memory_space<vmem>>, vector<1x8xf32>
    %81 = vector.broadcast %80 : vector<1x8xf32> to vector<128x8xf32>
    %82 = arith.addf %79, %81 : vector<128x8xf32>
    %cst_56 = arith.constant 0.000000e+00 : f32
    %83 = vector.broadcast %cst_56 : f32 to vector<128x8xf32>
    %84 = arith.maximumf %82, %83 : vector<128x8xf32>
    %85 = vector.shape_cast %84 : vector<128x8xf32> to vector<1x8x16x8xf32>
    %c0_57 = arith.constant 0 : index
    %c0_58 = arith.constant 0 : index
    %c0_59 = arith.constant 0 : index
    %c0_60 = arith.constant 0 : index
    %86 = vector.load %arg9[%c0_57, %c0_58, %c0_59, %c0_60] : memref<1x8x16x8xf32, #tpu.memory_space<vmem>>, vector<1x8x16x8xf32>
    tpu.vector_store %arg9[%c0_57, %c0_58, %c0_59, %c0_60], %85 {strides = array<i32>} : memref<1x8x16x8xf32, #tpu.memory_space<vmem>>, vector<1x8x16x8xf32>,
    return
  }
  func.func @transform_0(%arg0: i32, %arg1: i32) -> (i32, i32, i32, i32) {
    %c0_i32 = arith.constant 0 : i32
    %c0_i32_0 = arith.constant 0 : i32
    %c0_i32_1 = arith.constant 0 : i32
    return %arg0, %arg1, %c0_i32, %c0_i32_0 : i32, i32, i32, i32
  }
  func.func @transform_1(%arg0: i32, %arg1: i32) -> (i32, i32, i32, i32) {
    %c4_i32 = arith.constant 4 : i32
    %0 = arith.muli %arg1, %c4_i32 : i32
    %c1_i32 = arith.constant 1 : i32
    %1 = arith.subi %0, %c1_i32 : i32
    %c0_i32 = arith.constant 0 : i32
    %2 = arith.maxsi %1, %c0_i32 : i32
    %c0_i32_0 = arith.constant 0 : i32
    %c0_i32_1 = arith.constant 0 : i32
    %c0_i32_2 = arith.constant 0 : i32
    return %arg0, %2, %c0_i32_0, %c0_i32_1 : i32, i32, i32, i32
  }
  func.func @transform_2(%arg0: i32, %arg1: i32) -> (i32, i32, i32, i32) {
    %c1_i32 = arith.constant 1 : i32
    %0 = arith.addi %arg1, %c1_i32 : i32
    %c4_i32 = arith.constant 4 : i32
    %1 = arith.muli %0, %c4_i32 : i32
    %c7_i32 = arith.constant 7 : i32
    %2 = arith.minsi %1, %c7_i32 : i32
    %c0_i32 = arith.constant 0 : i32
    %c0_i32_0 = arith.constant 0 : i32
    %c0_i32_1 = arith.constant 0 : i32
    return %arg0, %2, %c0_i32, %c0_i32_0 : i32, i32, i32, i32
  }
  func.func @transform_3(%arg0: i32, %arg1: i32) -> (i32, i32) {
    %c0_i32 = arith.constant 0 : i32
    %c0_i32_0 = arith.constant 0 : i32
    %c0_i32_1 = arith.constant 0 : i32
    return %c0_i32, %c0_i32_0 : i32, i32
  }
  func.func @transform_4(%arg0: i32, %arg1: i32) -> (i32, i32) {
    %c0_i32 = arith.constant 0 : i32
    %c0_i32_0 = arith.constant 0 : i32
    %c0_i32_1 = arith.constant 0 : i32
    return %c0_i32, %c0_i32_0 : i32, i32
  }
  func.func @transform_5(%arg0: i32, %arg1: i32) -> (i32, i32) {
    %c0_i32 = arith.constant 0 : i32
    %c0_i32_0 = arith.constant 0 : i32
    %c0_i32_1 = arith.constant 0 : i32
    return %c0_i32, %c0_i32_0 : i32, i32
  }
  func.func @transform_6(%arg0: i32, %arg1: i32) -> (i32, i32) {
    %c0_i32 = arith.constant 0 : i32
    %c0_i32_0 = arith.constant 0 : i32
    %c0_i32_1 = arith.constant 0 : i32
    return %c0_i32, %c0_i32_0 : i32, i32
  }
  func.func @transform_7(%arg0: i32, %arg1: i32) -> (i32, i32, i32, i32) {
    %c0_i32 = arith.constant 0 : i32
    %c0_i32_0 = arith.constant 0 : i32
    %c0_i32_1 = arith.constant 0 : i32
    return %arg0, %arg1, %c0_i32, %c0_i32_0 : i32, i32, i32, i32
  }
}

</mosaic_0001>

<llo_original>
// kernel: double_conv.1
$region0: #{double_conv.1}
  #allocation0 [shape = 'u32[]', space=smem, size = 0x4, offset = 0x4, fixed_abs, tag = 'smem constant byte address 0x4 - core index']
  #allocation1 [shape = 'u32[72,128]{1,0:T(1,128)}', space=vmem, size = 0x9000, scoped, tag = 'internal scratch']
  #allocation2 [shape = 'f32[12,25,4]{2,1,0:T(8,128)}', space=vmem, size = 0x30000, scoped, tag = 'scratch operand']
  #allocation3 [shape = 'f32[10,25,8]{2,1,0:T(8,128)}', space=vmem, size = 0x28000, scoped, tag = 'scratch operand']
  %s0 = inlined_call_operand.vmem [shape: f32[2,16,16,4], index: 0, kind: input, shape index: {}, may-alias: {0,1,2}]
  %s1 = inlined_call_operand.vmem [shape: f32[2,16,16,4], index: 1, kind: input, shape index: {}, may-alias: {0,1,2}]
  %s2 = inlined_call_operand.vmem [shape: f32[2,16,16,4], index: 2, kind: input, shape index: {}, may-alias: {0,1,2}]
  %s3 = inlined_call_operand.vmem [shape: f32[36,8], index: 3, kind: input, shape index: {}]
  %s4 = inlined_call_operand.vmem [shape: f32[1,8], index: 4, kind: input, shape index: {}]
  %s5 = inlined_call_operand.vmem [shape: f32[72,8], index: 5, kind: input, shape index: {}]
  %s6 = inlined_call_operand.vmem [shape: f32[1,8], index: 6, kind: input, shape index: {}]
  %s7 = inlined_call_operand.vmem [shape: f32[2,16,16,8], index: 7, kind: output, shape index: {}]
  %s8 = sld [smem:[#allocation0]]
  $region77: #{double_conv.1} parent=0
    _
  %s10 = ssub.s32 1, %s8
  %s11 = scalar_select 0, %s10, %s8
  loop: start=0, step=1, limit=6
  $region2: #{double_conv.1} parent=0 // loop_pre_header
    _
  $region3: #{double_conv.1} parent=0 // loop_header
    %s13 = sphi 0, %s17
    %p14 = scmp.ge.s32.totalorder %s13, 6
    %s20 = sphi 0, %s32
    %s21 = sphi 0, %s28
    %s22 = sphi 0, %s20
    %s23 = sphi 0, %s21
    %s24 = sphi 0, %s22
    %s25 = sphi 0, %s23
    %s37 = sphi 0, %s39
    %s40 = sphi 0, %s37
    %s41 = sphi 0, %s40
    %s57 = sphi 0, %s41
    %s73 = sphi 0, %s75
    %s76 = sphi 0, %s73
    %s77 = sphi 0, %s76
    %s93 = sphi 0, %s77
    %s109 = sphi 0, %s111
    %s112 = sphi 0, %s109
    %s113 = sphi 0, %s112
    %s129 = sphi 0, %s113
    %s133 = sphi 0, %s133
    %s135 = sphi 0, %s133
    %s136 = sphi 0, %s135
    %s150 = sphi 0, %s136
    %s154 = sphi 0, %s154
    %s156 = sphi 0, %s154
    %s157 = sphi 0, %s156
    %s171 = sphi 0, %s157
    %s175 = sphi 0, %s175
    %s177 = sphi 0, %s175
    %s178 = sphi 0, %s177
    %s192 = sphi 0, %s178
    %s196 = sphi 0, %s196
    %s198 = sphi 0, %s196
    %s199 = sphi 0, %s198
    %s213 = sphi 0, %s199
    %s221 = sphi 0, %s223
    %s224 = sphi 0, %s221
    %s225 = sphi 0, %s224
    %s241 = sphi 0, %s225
  $region4: #{double_conv.1} parent=0 // loop_header_branch
    %16 = sbr.rel (%p14) target = $region8
  $region5: #{double_conv.1} parent=0 // loop_body
    %s18 = ssub.s32 %s13, 1
    %s19 = ssub.s32 %s13, 2
    %s26 = sadd.s32 1, %s21
    %p27 = scmp.ge.s32.totalorder %s26, 2
    %s28 = scalar_select %p27, 0, %s26
    %s29 = sadd.s32 1, %s20
    %s30 = scalar_select %p27, %s29, %s20
    %p31 = scmp.ge.s32.totalorder %s30, 2
    %s32 = scalar_select %p31, 0, %s30
    %s33 = ssub.s32 %s20, %s32
    %s34 = ssub.s32 %s21, %s28
    %s35 = sor.u32 %s33, %s34
    %p36 = scmp.eq.s32.totalorder %s35, 0
    %s38 = sadd.s32 %s37, 1
    %s39 = scalar_select %p36, %s37, %s38
    %p42 = pneg %p36
    %p43 = scmp.eq.s32.totalorder %s13, 3
    %p44 = por %p42, %p43
    %p45 = scmp.ne.s32.totalorder %s37, %s40
    %p46 = scmp.eq.s32.totalorder %s13, 0
    %p47 = por %p45, %p46
    %p48 = scmp.ne.s32.totalorder %s37, %s40
    %p49 = scmp.eq.s32.totalorder %s18, 3
    %p50 = por %p48, %p49
    %p51 = scmp.ne.s32.totalorder %s40, %s41
    %p52 = scmp.eq.s32.totalorder %s18, 0
    %p53 = por %p51, %p52
    %p54 = scmp.ne.s32.totalorder %s40, %s41
    %p55 = scmp.eq.s32.totalorder %s19, 3
    %p56 = por %p54, %p55
    %p58 = scmp.ne.s32.totalorder %s41, %s57
    %p59 = scmp.eq.s32.totalorder %s19, 0
    %p60 = por %p58, %p59
    %s61 = smul.u32 %s21, 4
    %s62 = ssub.s32 %s61, 1
    %p63 = scmp.gt.s32.totalorder %s62, 0
    %s64 = scalar_select %p63, %s62, 0
    %s65 = smul.u32 %s28, 4
    %s66 = ssub.s32 %s65, 1
    %p67 = scmp.gt.s32.totalorder %s66, 0
    %s68 = scalar_select %p67, %s66, 0
    %s69 = ssub.s32 %s20, %s32
    %s70 = ssub.s32 %s64, %s68
    %s71 = sor.u32 %s69, %s70
    %p72 = scmp.eq.s32.totalorder %s71, 0
    %s74 = sadd.s32 %s73, 1
    %s75 = scalar_select %p72, %s73, %s74
    %p78 = pneg %p72
    %p79 = scmp.eq.s32.totalorder %s13, 3
    %p80 = por %p78, %p79
    %p81 = scmp.ne.s32.totalorder %s73, %s76
    %p82 = scmp.eq.s32.totalorder %s13, 0
    %p83 = por %p81, %p82
    %p84 = scmp.ne.s32.totalorder %s73, %s76
    %p85 = scmp.eq.s32.totalorder %s18, 3
    %p86 = por %p84, %p85
    %p87 = scmp.ne.s32.totalorder %s76, %s77
    %p88 = scmp.eq.s32.totalorder %s18, 0
    %p89 = por %p87, %p88
    %p90 = scmp.ne.s32.totalorder %s76, %s77
    %p91 = scmp.eq.s32.totalorder %s19, 3
    %p92 = por %p90, %p91
    %p94 = scmp.ne.s32.totalorder %s77, %s93
    %p95 = scmp.eq.s32.totalorder %s19, 0
    %p96 = por %p94, %p95
    %s97 = sadd.s32 %s21, 1
    %s98 = smul.u32 %s97, 4
    %p99 = scmp.lt.s32.totalorder %s98, 7
    %s100 = scalar_select %p99, %s98, 7
    %s101 = sadd.s32 %s28, 1
    %s102 = smul.u32 %s101, 4
    %p103 = scmp.lt.s32.totalorder %s102, 7
    %s104 = scalar_select %p103, %s102, 7
    %s105 = ssub.s32 %s20, %s32
    %s106 = ssub.s32 %s100, %s104
    %s107 = sor.u32 %s105, %s106
    %p108 = scmp.eq.s32.totalorder %s107, 0
    %s110 = sadd.s32 %s109, 1
    %s111 = scalar_select %p108, %s109, %s110
    %p114 = pneg %p108
    %p115 = scmp.eq.s32.totalorder %s13, 3
    %p116 = por %p114, %p115
    %p117 = scmp.ne.s32.totalorder %s109, %s112
    %p118 = scmp.eq.s32.totalorder %s13, 0
    %p119 = por %p117, %p118
    %p120 = scmp.ne.s32.totalorder %s109, %s112
    %p121 = scmp.eq.s32.totalorder %s18, 3
    %p122 = por %p120, %p121
    %p123 = scmp.ne.s32.totalorder %s112, %s113
    %p124 = scmp.eq.s32.totalorder %s18, 0
    %p125 = por %p123, %p124
    %p126 = scmp.ne.s32.totalorder %s112, %s113
    %p127 = scmp.eq.s32.totalorder %s19, 3
    %p128 = por %p126, %p127
    %p130 = scmp.ne.s32.totalorder %s113, %s129
    %p131 = scmp.eq.s32.totalorder %s19, 0
    %p132 = por %p130, %p131
    %s134 = sadd.s32 %s133, 1
    %p137 = scmp.eq.s32.totalorder %s13, 3
    %p138 = scmp.ne.s32.totalorder %s133, %s135
    %p139 = scmp.eq.s32.totalorder %s13, 0
    %p140 = por %p138, %p139
    %p141 = scmp.ne.s32.totalorder %s133, %s135
    %p142 = scmp.eq.s32.totalorder %s18, 3
    %p143 = por %p141, %p142
    %p144 = scmp.ne.s32.totalorder %s135, %s136
    %p145 = scmp.eq.s32.totalorder %s18, 0
    %p146 = por %p144, %p145
    %p147 = scmp.ne.s32.totalorder %s135, %s136
    %p148 = scmp.eq.s32.totalorder %s19, 3
    %p149 = por %p147, %p148
    %p151 = scmp.ne.s32.totalorder %s136, %s150
    %p152 = scmp.eq.s32.totalorder %s19, 0
    %p153 = por %p151, %p152
    %s155 = sadd.s32 %s154, 1
    %p158 = scmp.eq.s32.totalorder %s13, 3
    %p159 = scmp.ne.s32.totalorder %s154, %s156
    %p160 = scmp.eq.s32.totalorder %s13, 0
    %p161 = por %p159, %p160
    %p162 = scmp.ne.s32.totalorder %s154, %s156
    %p163 = scmp.eq.s32.totalorder %s18, 3
    %p164 = por %p162, %p163
    %p165 = scmp.ne.s32.totalorder %s156, %s157
    %p166 = scmp.eq.s32.totalorder %s18, 0
    %p167 = por %p165, %p166
    %p168 = scmp.ne.s32.totalorder %s156, %s157
    %p169 = scmp.eq.s32.totalorder %s19, 3
    %p170 = por %p168, %p169
    %p172 = scmp.ne.s32.totalorder %s157, %s171
    %p173 = scmp.eq.s32.totalorder %s19, 0
    %p174 = por %p172, %p173
    %s176 = sadd.s32 %s175, 1
    %p179 = scmp.eq.s32.totalorder %s13, 3
    %p180 = scmp.ne.s32.totalorder %s175, %s177
    %p181 = scmp.eq.s32.totalorder %s13, 0
    %p182 = por %p180, %p181
    %p183 = scmp.ne.s32.totalorder %s175, %s177
    %p184 = scmp.eq.s32.totalorder %s18, 3
    %p185 = por %p183, %p184
    %p186 = scmp.ne.s32.totalorder %s177, %s178
    %p187 = scmp.eq.s32.totalorder %s18, 0
    %p188 = por %p186, %p187
    %p189 = scmp.ne.s32.totalorder %s177, %s178
    %p190 = scmp.eq.s32.totalorder %s19, 3
    %p191 = por %p189, %p190
    %p193 = scmp.ne.s32.totalorder %s178, %s192
    %p194 = scmp.eq.s32.totalorder %s19, 0
    %p195 = por %p193, %p194
    %s197 = sadd.s32 %s196, 1
    %p200 = scmp.eq.s32.totalorder %s13, 3
    %p201 = scmp.ne.s32.totalorder %s196, %s198
    %p202 = scmp.eq.s32.totalorder %s13, 0
    %p203 = por %p201, %p202
    %p204 = scmp.ne.s32.totalorder %s196, %s198
    %p205 = scmp.eq.s32.totalorder %s18, 3
    %p206 = por %p204, %p205
    %p207 = scmp.ne.s32.totalorder %s198, %s199
    %p208 = scmp.eq.s32.totalorder %s18, 0
    %p209 = por %p207, %p208
    %p210 = scmp.ne.s32.totalorder %s198, %s199
    %p211 = scmp.eq.s32.totalorder %s19, 3
    %p212 = por %p210, %p211
    %p214 = scmp.ne.s32.totalorder %s199, %s213
    %p215 = scmp.eq.s32.totalorder %s19, 0
    %p216 = por %p214, %p215
    %s217 = ssub.s32 %s20, %s32
    %s218 = ssub.s32 %s21, %s28
    %s219 = sor.u32 %s217, %s218
    %p220 = scmp.eq.s32.totalorder %s219, 0
    %s222 = sadd.s32 %s221, 1
    %s223 = scalar_select %p220, %s221, %s222
    %p226 = pneg %p220
    %p227 = scmp.eq.s32.totalorder %s13, 3
    %p228 = por %p226, %p227
    %p229 = scmp.ne.s32.totalorder %s221, %s224
    %p230 = scmp.eq.s32.totalorder %s13, 0
    %p231 = por %p229, %p230
    %p232 = scmp.ne.s32.totalorder %s221, %s224
    %p233 = scmp.eq.s32.totalorder %s18, 3
    %p234 = por %p232, %p233
    %p235 = scmp.ne.s32.totalorder %s224, %s225
    %p236 = scmp.eq.s32.totalorder %s18, 0
    %p237 = por %p235, %p236
    %p238 = scmp.ne.s32.totalorder %s224, %s225
    %p239 = scmp.eq.s32.totalorder %s19, 3
    %p240 = por %p238, %p239
    %p242 = scmp.ne.s32.totalorder %s225, %s241
    %p243 = scmp.eq.s32.totalorder %s19, 0
    %p244 = por %p242, %p243
    %p245 = scmp.le.s32.totalorder 1, %s13
    %p246 = scmp.lt.s32.totalorder %s13, 5
    %p247 = pnand %p245, %p246
    %p248 = pneg %p247
    // Predicated region
    $region9: #{double_conv.1} parent=5 // pred_check
      _
    $region10: #{double_conv.1} parent=5 // pred_check_branch
      %250 = sbr.rel (%p247) target = $region12
    $region11: #{double_conv.1} parent=5 // pred_region
      %s251 = ssub.s32 %s13, 1
      // Predicated region
      $region13: #{double_conv.1} parent=11 // pred_check
        %p252 = pneg %p146
      $region14: #{double_conv.1} parent=11 // pred_check_branch
        %254 = sbr.rel (%p252) target = $region16
      $region15: #{double_conv.1} parent=11 // pred_region
        _
      $region16: #{double_conv.1} parent=11 // pred_fallthru
        _
      // Predicated region
      $region17: #{double_conv.1} parent=11 // pred_check
        %p255 = pneg %p167
      $region18: #{double_conv.1} parent=11 // pred_check_branch
        %257 = sbr.rel (%p255) target = $region20
      $region19: #{double_conv.1} parent=11 // pred_region
        _
      $region20: #{double_conv.1} parent=11 // pred_fallthru
        _
      // Predicated region
      $region21: #{double_conv.1} parent=11 // pred_check
        %p258 = pneg %p188
      $region22: #{double_conv.1} parent=11 // pred_check_branch
        %260 = sbr.rel (%p258) target = $region24
      $region23: #{double_conv.1} parent=11 // pred_region
        _
      $region24: #{double_conv.1} parent=11 // pred_fallthru
        _
      // Predicated region
      $region25: #{double_conv.1} parent=11 // pred_check
        %p261 = pneg %p209
      $region26: #{double_conv.1} parent=11 // pred_check_branch
        %263 = sbr.rel (%p261) target = $region28
      $region27: #{double_conv.1} parent=11 // pred_region
        _
      $region28: #{double_conv.1} parent=11 // pred_fallthru
        _
    $region12: #{double_conv.1} parent=5 // pred_fallthru
      _
    %p264 = scmp.lt.s32.totalorder %s13, 4
    // Predicated region
    $region29: #{double_conv.1} parent=5 // pred_check
      %p265 = pneg %p264
    $region30: #{double_conv.1} parent=5 // pred_check_branch
      %267 = sbr.rel (%p265) target = $region32
    $region31: #{double_conv.1} parent=5 // pred_region
      // Predicated region
      $region33: #{double_conv.1} parent=31 // pred_check
        %p268 = pneg %p47
      $region34: #{double_conv.1} parent=31 // pred_check_branch
        %270 = sbr.rel (%p268) target = $region36
      $region35: #{double_conv.1} parent=31 // pred_region
        %s271 = smul.u32 8, %s21
        %p272 = scmp.lt.s32.totalorder %s20, 1
        %s273 = scalar_select %p272, %s20, 1
        %p274 = scmp.lt.s32.totalorder %s271, 15
        %s275 = scalar_select %p274, %s271, 15
        %s276 = smul.addr %s275, 2
        %s277 = smul.addr %s273, 32
        %s278 = sadd.s32 %s276, %s277
        %s279 = smul.addr %s278, 8
        %s280 = scalar_lea.vmem %s0, %s279
        %s281 = smul.u32 8, %s21
      $region36: #{double_conv.1} parent=31 // pred_fallthru
        _
      // Predicated region
      $region37: #{double_conv.1} parent=31 // pred_check
        %p282 = pneg %p83
      $region38: #{double_conv.1} parent=31 // pred_check_branch
        %284 = sbr.rel (%p282) target = $region40
      $region39: #{double_conv.1} parent=31 // pred_region
        %s285 = smul.u32 %s21, 4
        %s286 = ssub.s32 %s285, 1
        %p287 = scmp.gt.s32.totalorder %s286, 0
        %s288 = scalar_select %p287, %s286, 0
        %s289 = smul.u32 2, %s288
        %p290 = scmp.lt.s32.totalorder %s20, 1
        %s291 = scalar_select %p290, %s20, 1
        %p292 = scmp.lt.s32.totalorder %s289, 15
        %s293 = scalar_select %p292, %s289, 15
        %s294 = smul.addr %s293, 2
        %s295 = smul.addr %s291, 32
        %s296 = sadd.s32 %s294, %s295
        %s297 = smul.addr %s296, 8
        %s298 = scalar_lea.vmem %s1, %s297
        %s299 = smul.u32 %s21, 4
        %s300 = ssub.s32 %s299, 1
        %p301 = scmp.gt.s32.totalorder %s300, 0
        %s302 = scalar_select %p301, %s300, 0
        %s303 = smul.u32 2, %s302
      $region40: #{double_conv.1} parent=31 // pred_fallthru
        _
      // Predicated region
      $region41: #{double_conv.1} parent=31 // pred_check
        %p304 = pneg %p119
      $region42: #{double_conv.1} parent=31 // pred_check_branch
        %306 = sbr.rel (%p304) target = $region44
      $region43: #{double_conv.1} parent=31 // pred_region
        %s307 = sadd.s32 %s21, 1
        %s308 = smul.u32 %s307, 4
        %p309 = scmp.lt.s32.totalorder %s308, 7
        %s310 = scalar_select %p309, %s308, 7
        %s311 = smul.u32 2, %s310
        %p312 = scmp.lt.s32.totalorder %s20, 1
        %s313 = scalar_select %p312, %s20, 1
        %p314 = scmp.lt.s32.totalorder %s311, 15
        %s315 = scalar_select %p314, %s311, 15
        %s316 = smul.addr %s315, 2
        %s317 = smul.addr %s313, 32
        %s318 = sadd.s32 %s316, %s317
        %s319 = smul.addr %s318, 8
        %s320 = scalar_lea.vmem %s2, %s319
        %s321 = sadd.s32 %s21, 1
        %s322 = smul.u32 %s321, 4
        %p323 = scmp.lt.s32.totalorder %s322, 7
        %s324 = scalar_select %p323, %s322, 7
        %s325 = smul.u32 2, %s324
      $region44: #{double_conv.1} parent=31 // pred_fallthru
        _
    $region32: #{double_conv.1} parent=5 // pred_fallthru
      _
    %p326 = scmp.le.s32.totalorder 1, %s13
    %p327 = scmp.lt.s32.totalorder %s13, 5
    %p328 = pnand %p326, %p327
    %p329 = pneg %p328
    // Predicated region
    $region45: #{double_conv.1} parent=5 // pred_check
      _
    $region46: #{double_conv.1} parent=5 // pred_check_branch
      %331 = sbr.rel (%p328) target = $region48
    $region47: #{double_conv.1} parent=5 // pred_region
      %s332 = ssub.s32 %s13, 1
      %s333 = smul.u32 8, %s23
      %p334 = scmp.lt.s32.totalorder %s22, 1
      %s335 = scalar_select %p334, %s22, 1
      %p336 = scmp.lt.s32.totalorder %s333, 15
      %s337 = scalar_select %p336, %s333, 15
      %s338 = smul.addr %s337, 2
      %s339 = smul.addr %s335, 32
      %s340 = sadd.s32 %s338, %s339
      %s341 = smul.addr %s340, 8
      %s342 = scalar_lea.vmem %s0, %s341
      %p343 = pneg %p53
      %p344 = pneg %p50
      %s345 = smul.u32 %s23, 4
      %s346 = ssub.s32 %s345, 1
      %p347 = scmp.gt.s32.totalorder %s346, 0
      %s348 = scalar_select %p347, %s346, 0
      %s349 = smul.u32 2, %s348
      %p350 = scmp.lt.s32.totalorder %s22, 1
      %s351 = scalar_select %p350, %s22, 1
      %p352 = scmp.lt.s32.totalorder %s349, 15
      %s353 = scalar_select %p352, %s349, 15
      %s354 = smul.addr %s353, 2
      %s355 = smul.addr %s351, 32
      %s356 = sadd.s32 %s354, %s355
      %s357 = smul.addr %s356, 8
      %s358 = scalar_lea.vmem %s1, %s357
      %p359 = pneg %p89
      %p360 = pneg %p86
      %s361 = sadd.s32 %s23, 1
      %s362 = smul.u32 %s361, 4
      %p363 = scmp.lt.s32.totalorder %s362, 7
      %s364 = scalar_select %p363, %s362, 7
      %s365 = smul.u32 2, %s364
      %p366 = scmp.lt.s32.totalorder %s22, 1
      %s367 = scalar_select %p366, %s22, 1
      %p368 = scmp.lt.s32.totalorder %s365, 15
      %s369 = scalar_select %p368, %s365, 15
      %s370 = smul.addr %s369, 2
      %s371 = smul.addr %s367, 32
      %s372 = sadd.s32 %s370, %s371
      %s373 = smul.addr %s372, 8
      %s374 = scalar_lea.vmem %s2, %s373
      %p375 = pneg %p125
      %p376 = pneg %p122
      %p377 = pneg %p146
      %p378 = pneg %p143
      %p379 = pneg %p167
      %p380 = pneg %p164
      %p381 = pneg %p188
      %p382 = pneg %p185
      %p383 = pneg %p209
      %p384 = pneg %p206
      %p385 = pneg %p237
      %p386 = pneg %p234
      %s387 = smul.u32 8, %s23
      %p388 = scmp.lt.s32.totalorder %s22, 1
      %s389 = scalar_select %p388, %s22, 1
      %p390 = scmp.lt.s32.totalorder %s387, 15
      %s391 = scalar_select %p390, %s387, 15
      %s392 = smul.addr %s391, 2
      %s393 = smul.addr %s389, 32
      %s394 = sadd.s32 %s392, %s393
      %s395 = smul.addr %s394, 8
      %s396 = scalar_lea.vmem %s7, %s395
      %s397 = smul.u32 8, %s23
      %p398 = scmp.lt.s32.totalorder %s22, 1
      %s399 = scalar_select %p398, %s22, 1
      %p400 = scmp.lt.s32.totalorder %s397, 15
      %s401 = scalar_select %p400, %s397, 15
      %s402 = smul.addr %s401, 2
      %s403 = smul.addr %s399, 32
      %s404 = sadd.s32 %s402, %s403
      %s405 = smul.addr %s404, 8
      %s406 = scalar_lea.vmem %s0, %s405
      %s407 = smul.u32 8, %s23
      %s408 = smul.u32 %s23, 4
      %s409 = ssub.s32 %s408, 1
      %p410 = scmp.gt.s32.totalorder %s409, 0
      %s411 = scalar_select %p410, %s409, 0
      %s412 = smul.u32 2, %s411
      %p413 = scmp.lt.s32.totalorder %s22, 1
      %s414 = scalar_select %p413, %s22, 1
      %p415 = scmp.lt.s32.totalorder %s412, 15
      %s416 = scalar_select %p415, %s412, 15
      %s417 = smul.addr %s416, 2
      %s418 = smul.addr %s414, 32
      %s419 = sadd.s32 %s417, %s418
      %s420 = smul.addr %s419, 8
      %s421 = scalar_lea.vmem %s1, %s420
      %s422 = smul.u32 %s23, 4
      %s423 = ssub.s32 %s422, 1
      %p424 = scmp.gt.s32.totalorder %s423, 0
      %s425 = scalar_select %p424, %s423, 0
      %s426 = smul.u32 2, %s425
      %s427 = sadd.s32 %s23, 1
      %s428 = smul.u32 %s427, 4
      %p429 = scmp.lt.s32.totalorder %s428, 7
      %s430 = scalar_select %p429, %s428, 7
      %s431 = smul.u32 2, %s430
      %p432 = scmp.lt.s32.totalorder %s22, 1
      %s433 = scalar_select %p432, %s22, 1
      %p434 = scmp.lt.s32.totalorder %s431, 15
      %s435 = scalar_select %p434, %s431, 15
      %s436 = smul.addr %s435, 2
      %s437 = smul.addr %s433, 32
      %s438 = sadd.s32 %s436, %s437
      %s439 = smul.addr %s438, 8
      %s440 = scalar_lea.vmem %s2, %s439
      %s441 = sadd.s32 %s23, 1
      %s442 = smul.u32 %s441, 4
      %p443 = scmp.lt.s32.totalorder %s442, 7
      %s444 = scalar_select %p443, %s442, 7
      %s445 = smul.u32 2, %s444
      %s446 = smul.u32 8, %s23
      %p447 = scmp.lt.s32.totalorder %s22, 1
      %s448 = scalar_select %p447, %s22, 1
      %p449 = scmp.lt.s32.totalorder %s446, 15
      %s450 = scalar_select %p449, %s446, 15
      %s451 = smul.addr %s450, 2
      %s452 = smul.addr %s448, 32
      %s453 = sadd.s32 %s451, %s452
      %s454 = smul.addr %s453, 8
      %s455 = scalar_lea.vmem %s7, %s454
      %s456 = smul.u32 8, %s23
      %vm457 = vcmask 24576
      %458 = vst.msk [vmem:[#allocation2 + $0x7] sm:$0x1] %vm457, 0.0
      %459 = vst.msk [vmem:[#allocation2 + $0x27] sm:$0x1] %vm457, 0.0
      %460 = vst.msk [vmem:[#allocation2 + $0x47] sm:$0x1] %vm457, 0.0
      %461 = vst.msk [vmem:[#allocation2 + $0x67] sm:$0x1] %vm457, 0.0
      %462 = vst.msk [vmem:[#allocation2 + $0x87] sm:$0x1] %vm457, 0.0
      %463 = vst.msk [vmem:[#allocation2 + $0xa7] sm:$0x1] %vm457, 0.0
      %464 = vst.msk [vmem:[#allocation2 + $0xc7] sm:$0x1] %vm457, 0.0
      %465 = vst.msk [vmem:[#allocation2 + $0xe7] sm:$0x1] %vm457, 0.0
      %466 = vst.msk [vmem:[#allocation2 + $0x107] sm:$0x1] %vm457, 0.0
      %467 = vst.msk [vmem:[#allocation2 + $0x127] sm:$0x1] %vm457, 0.0
      %468 = vst.msk [vmem:[#allocation2 + $0x147] sm:$0x1] %vm457, 0.0
      %469 = vst.msk [vmem:[#allocation2 + $0x167] sm:$0x1] %vm457, 0.0
      %470 = vst.msk [vmem:[#allocation2 + $0x18] sm:$0x1] %vm457, 0.0
      %471 = vst.msk [vmem:[#allocation2 + $0x38] sm:$0x1] %vm457, 0.0
      %472 = vst.msk [vmem:[#allocation2 + $0x58] sm:$0x1] %vm457, 0.0
      %473 = vst.msk [vmem:[#allocation2 + $0x78] sm:$0x1] %vm457, 0.0
      %474 = vst.msk [vmem:[#allocation2 + $0x98] sm:$0x1] %vm457, 0.0
      %475 = vst.msk [vmem:[#allocation2 + $0xb8] sm:$0x1] %vm457, 0.0
      %476 = vst.msk [vmem:[#allocation2 + $0xd8] sm:$0x1] %vm457, 0.0
      %477 = vst.msk [vmem:[#allocation2 + $0xf8] sm:$0x1] %vm457, 0.0
      %478 = vst.msk [vmem:[#allocation2 + $0x118] sm:$0x1] %vm457, 0.0
      %479 = vst.msk [vmem:[#allocation2 + $0x138] sm:$0x1] %vm457, 0.0
      %480 = vst.msk [vmem:[#allocation2 + $0x158] sm:$0x1] %vm457, 0.0
      %481 = vst.msk [vmem:[#allocation2 + $0x178] sm:$0x1] %vm457, 0.0
      %v482 = vld [vmem:[%s406] sm:$0xff]
      %v483 = vld [vmem:[%s406 + $0x8] sm:$0xff]
      %v484 = vld [vmem:[%s406 + $0x10] sm:$0xff]
      %v485 = vld [vmem:[%s406 + $0x18] sm:$0xff]
      %v486 = vld [vmem:[%s406 + $0x20] sm:$0xff]
      %v487 = vld [vmem:[%s406 + $0x28] sm:$0xff]
      %v488 = vld [vmem:[%s406 + $0x30] sm:$0xff]
      %v489 = vld [vmem:[%s406 + $0x38] sm:$0xff]
      %v490 = vld [vmem:[%s406 + $0x40] sm:$0xff]
      %v491 = vld [vmem:[%s406 + $0x48] sm:$0xff]
      %v492 = vld [vmem:[%s406 + $0x50] sm:$0xff]
      %v493 = vld [vmem:[%s406 + $0x58] sm:$0xff]
      %v494 = vld [vmem:[%s406 + $0x60] sm:$0xff]
      %v495 = vld [vmem:[%s406 + $0x68] sm:$0xff]
      %v496 = vld [vmem:[%s406 + $0x70] sm:$0xff]
      %v497 = vld [vmem:[%s406 + $0x78] sm:$0xff]
      %s498 = scalar_lea.vmem [#allocation2], 64
      %vm499 = vcmask 31744
      %500 = vst.msk [vmem:[%s498 + $0x8] sm:$0xff] %vm499, %v482
      %501 = vst.msk [vmem:[%s498 + $0x10] sm:$0xff] %vm499, %v483
      %502 = vst.msk [vmem:[%s498 + $0x28] sm:$0xff] %vm499, %v484
      %503 = vst.msk [vmem:[%s498 + $0x30] sm:$0xff] %vm499, %v485
      %504 = vst.msk [vmem:[%s498 + $0x48] sm:$0xff] %vm499, %v486
      %505 = vst.msk [vmem:[%s498 + $0x50] sm:$0xff] %vm499, %v487
      %506 = vst.msk [vmem:[%s498 + $0x68] sm:$0xff] %vm499, %v488
      %507 = vst.msk [vmem:[%s498 + $0x70] sm:$0xff] %vm499, %v489
      %508 = vst.msk [vmem:[%s498 + $0x88] sm:$0xff] %vm499, %v490
      %509 = vst.msk [vmem:[%s498 + $0x90] sm:$0xff] %vm499, %v491
      %510 = vst.msk [vmem:[%s498 + $0xa8] sm:$0xff] %vm499, %v492
      %511 = vst.msk [vmem:[%s498 + $0xb0] sm:$0xff] %vm499, %v493
      %512 = vst.msk [vmem:[%s498 + $0xc8] sm:$0xff] %vm499, %v494
      %513 = vst.msk [vmem:[%s498 + $0xd0] sm:$0xff] %vm499, %v495
      %514 = vst.msk [vmem:[%s498 + $0xe8] sm:$0xff] %vm499, %v496
      %515 = vst.msk [vmem:[%s498 + $0xf0] sm:$0xff] %vm499, %v497
      %v516 = vld [vmem:[%s421] sm:$0xff]
      %v517 = vld [vmem:[%s421 + $0x8] sm:$0xff]
      %v518 = vld [vmem:[%s421 + $0x10] sm:$0xff]
      %v519 = vld [vmem:[%s421 + $0x18] sm:$0xff]
      %520 = vst.msk [vmem:[#allocation2 + $0x8] sm:$0xff] %vm499, %v516
      %521 = vst.msk [vmem:[#allocation2 + $0x10] sm:$0xff] %vm499, %v517
      %522 = vst.msk [vmem:[#allocation2 + $0x28] sm:$0xff] %vm499, %v518
      %523 = vst.msk [vmem:[#allocation2 + $0x30] sm:$0xff] %vm499, %v519
      %v524 = vld [vmem:[%s440] sm:$0xff]
      %v525 = vld [vmem:[%s440 + $0x8] sm:$0xff]
      %v526 = vld [vmem:[%s440 + $0x10] sm:$0xff]
      %v527 = vld [vmem:[%s440 + $0x18] sm:$0xff]
      %s528 = scalar_lea.vmem [#allocation2], 320
      %529 = vst.msk [vmem:[%s528 + $0x8] sm:$0xff] %vm499, %v524
      %530 = vst.msk [vmem:[%s528 + $0x10] sm:$0xff] %vm499, %v525
      %531 = vst.msk [vmem:[%s528 + $0x28] sm:$0xff] %vm499, %v526
      %532 = vst.msk [vmem:[%s528 + $0x30] sm:$0xff] %vm499, %v527
      %p533 = scmp.eq.s32.totalorder %s23, 0
      // Predicated region
      $region49: #{double_conv.1} parent=47 // pred_check
        %p534 = pneg %p533
      $region50: #{double_conv.1} parent=47 // pred_check_branch
        %536 = sbr.rel (%p534) target = $region52
      $region51: #{double_conv.1} parent=47 // pred_region
        %537 = vst.msk [vmem:[#allocation2 + $0x8] sm:$0xff] %vm499, 0.0
        %538 = vst.msk [vmem:[#allocation2 + $0x10] sm:$0xff] %vm499, 0.0
        %539 = vst.msk [vmem:[#allocation2 + $0x28] sm:$0xff] %vm499, 0.0
        %540 = vst.msk [vmem:[#allocation2 + $0x30] sm:$0xff] %vm499, 0.0
      $region52: #{double_conv.1} parent=47 // pred_fallthru
        _
      %p541 = scmp.eq.s32.totalorder %s23, 1
      // Predicated region
      $region53: #{double_conv.1} parent=47 // pred_check
        %p542 = pneg %p541
      $region54: #{double_conv.1} parent=47 // pred_check_branch
        %544 = sbr.rel (%p542) target = $region56
      $region55: #{double_conv.1} parent=47 // pred_region
        %545 = vst.msk [vmem:[%s528 + $0x8] sm:$0xff] %vm499, 0.0
        %546 = vst.msk [vmem:[%s528 + $0x10] sm:$0xff] %vm499, 0.0
        %547 = vst.msk [vmem:[%s528 + $0x28] sm:$0xff] %vm499, 0.0
        %548 = vst.msk [vmem:[%s528 + $0x30] sm:$0xff] %vm499, 0.0
      $region56: #{double_conv.1} parent=47 // pred_fallthru
        _
      %v549 = vld [vmem:[#allocation2 + $0x7] sm:$0xff]
      %v550 = vld [vmem:[#allocation2 + $0xf] sm:$0xff]
      %v551 = vld [vmem:[#allocation2 + $0x17] sm:$0x3]
      %v552 = vld [vmem:[#allocation2 + $0x27] sm:$0xff]
      %v553 = vld [vmem:[#allocation2 + $0x2f] sm:$0xff]
      %v554 = vld [vmem:[#allocation2 + $0x37] sm:$0x3]
      %v555 = vld [vmem:[#allocation2 + $0x47] sm:$0xff]
      %v556 = vld [vmem:[#allocation2 + $0x4f] sm:$0xff]
      %v557 = vld [vmem:[#allocation2 + $0x57] sm:$0x3]
      %v558 = vld [vmem:[#allocation2 + $0x67] sm:$0xff]
      %v559 = vld [vmem:[#allocation2 + $0x6f] sm:$0xff]
      %v560 = vld [vmem:[#allocation2 + $0x77] sm:$0x3]
      %v561 = vld [vmem:[#allocation2 + $0x87] sm:$0xff]
      %v562 = vld [vmem:[#allocation2 + $0x8f] sm:$0xff]
      %v563 = vld [vmem:[#allocation2 + $0x97] sm:$0x3]
      %v564 = vld [vmem:[#allocation2 + $0xa7] sm:$0xff]
      %v565 = vld [vmem:[#allocation2 + $0xaf] sm:$0xff]
      %v566 = vld [vmem:[#allocation2 + $0xb7] sm:$0x3]
      %v567 = vld [vmem:[#allocation2 + $0xc7] sm:$0xff]
      %v568 = vld [vmem:[#allocation2 + $0xcf] sm:$0xff]
      %v569 = vld [vmem:[#allocation2 + $0xd7] sm:$0x3]
      %v570 = vld [vmem:[#allocation2 + $0xe7] sm:$0xff]
      %v571 = vld [vmem:[#allocation2 + $0xef] sm:$0xff]
      %v572 = vld [vmem:[#allocation2 + $0xf7] sm:$0x3]
      %v573 = vld [vmem:[#allocation2 + $0x107] sm:$0xff]
      %v574 = vld [vmem:[#allocation2 + $0x10f] sm:$0xff]
      %v575 = vld [vmem:[#allocation2 + $0x117] sm:$0x3]
      %v576 = vld [vmem:[#allocation2 + $0x127] sm:$0xff]
      %v577 = vld [vmem:[#allocation2 + $0x12f] sm:$0xff]
      %v578 = vld [vmem:[#allocation2 + $0x137] sm:$0x3]
      %v579 = vld [vmem:[#allocation2 + $0x147] sm:$0xff]
      %v580 = vld [vmem:[#allocation2 + $0x14f] sm:$0xff]
      %v581 = vld [vmem:[#allocation2 + $0x157] sm:$0x3]
      %v582 = vld [vmem:[#allocation2 + $0x167] sm:$0xff]
      %v583 = vld [vmem:[#allocation2 + $0x16f] sm:$0xff]
      %v584 = vld [vmem:[#allocation2 + $0x177] sm:$0x3]
      %vm615 = vcmask 1046528
      %v616 = vrot.slane %v549, 1
      %v617 = vrot.slane %v550, 1
      %v618 = vsel %vm615, %v616, %v617
      %v619 = vrot.slane %v551, 1
      %v620 = vsel %vm615, %v617, %v619
      %v621 = vrot.slane %v552, 1
      %v622 = vrot.slane %v553, 1
      %v623 = vsel %vm615, %v621, %v622
      %v624 = vrot.slane %v554, 1
      %v625 = vsel %vm615, %v622, %v624
      %v626 = vrot.slane %v555, 1
      %v627 = vrot.slane %v556, 1
      %v628 = vsel %vm615, %v626, %v627
      %v629 = vrot.slane %v557, 1
      %v630 = vsel %vm615, %v627, %v629
      %v631 = vrot.slane %v558, 1
      %v632 = vrot.slane %v559, 1
      %v633 = vsel %vm615, %v631, %v632
      %v634 = vrot.slane %v560, 1
      %v635 = vsel %vm615, %v632, %v634
      %v636 = vrot.slane %v561, 1
      %v637 = vrot.slane %v562, 1
      %v638 = vsel %vm615, %v636, %v637
      %v639 = vrot.slane %v563, 1
      %v640 = vsel %vm615, %v637, %v639
      %v641 = vrot.slane %v564, 1
      %v642 = vrot.slane %v565, 1
      %v643 = vsel %vm615, %v641, %v642
      %v644 = vrot.slane %v566, 1
      %v645 = vsel %vm615, %v642, %v644
      %v646 = vrot.slane %v567, 1
      %v647 = vrot.slane %v568, 1
      %v648 = vsel %vm615, %v646, %v647
      %v649 = vrot.slane %v569, 1
      %v650 = vsel %vm615, %v647, %v649
      %v651 = vrot.slane %v570, 1
      %v652 = vrot.slane %v571, 1
      %v653 = vsel %vm615, %v651, %v652
      %v654 = vrot.slane %v572, 1
      %v655 = vsel %vm615, %v652, %v654
      %v656 = vrot.slane %v573, 1
      %v657 = vrot.slane %v574, 1
      %v658 = vsel %vm615, %v656, %v657
      %v659 = vrot.slane %v575, 1
      %v660 = vsel %vm615, %v657, %v659
      %v661 = vrot.slane %v576, 1
      %v662 = vrot.slane %v577, 1
      %v663 = vsel %vm615, %v661, %v662
      %v664 = vrot.slane %v578, 1
      %v665 = vsel %vm615, %v662, %v664
      %666 = vrot.lane.b32.xlu0 %v618, 4
      %v667 = vpop.permute.xlu0 %666
      %668 = vrot.lane.b32.xlu0 %v620, 4
      %v669 = vpop.permute.xlu0 %668
      %670 = vrot.lane.b32.xlu0 %v623, 4
      %v671 = vpop.permute.xlu0 %670
      %672 = vrot.lane.b32.xlu0 %v625, 4
      %v673 = vpop.permute.xlu0 %672
      %674 = vrot.lane.b32.xlu0 %v628, 4
      %v675 = vpop.permute.xlu0 %674
      %676 = vrot.lane.b32.xlu0 %v630, 4
      %v677 = vpop.permute.xlu0 %676
      %678 = vrot.lane.b32.xlu0 %v633, 4
      %v679 = vpop.permute.xlu0 %678
      %680 = vrot.lane.b32.xlu0 %v635, 4
      %v681 = vpop.permute.xlu0 %680
      %682 = vrot.lane.b32.xlu0 %v638, 4
      %v683 = vpop.permute.xlu0 %682
      %684 = vrot.lane.b32.xlu0 %v640, 4
      %v685 = vpop.permute.xlu0 %684
      %686 = vrot.lane.b32.xlu0 %v643, 4
      %v687 = vpop.permute.xlu0 %686
      %688 = vrot.lane.b32.xlu0 %v645, 4
      %v689 = vpop.permute.xlu0 %688
      %690 = vrot.lane.b32.xlu0 %v648, 4
      %v691 = vpop.permute.xlu0 %690
      %692 = vrot.lane.b32.xlu0 %v650, 4
      %v693 = vpop.permute.xlu0 %692
      %694 = vrot.lane.b32.xlu0 %v653, 4
      %v695 = vpop.permute.xlu0 %694
      %696 = vrot.lane.b32.xlu0 %v655, 4
      %v697 = vpop.permute.xlu0 %696
      %698 = vrot.lane.b32.xlu0 %v658, 4
      %v699 = vpop.permute.xlu0 %698
      %700 = vrot.lane.b32.xlu0 %v660, 4
      %v701 = vpop.permute.xlu0 %700
      %702 = vrot.lane.b32.xlu0 %v663, 4
      %v703 = vpop.permute.xlu0 %702
      %704 = vrot.lane.b32.xlu0 %v665, 4
      %v705 = vpop.permute.xlu0 %704
      %vm726 = vcmask 1045504
      %v727 = vrot.slane %v549, 2
      %v728 = vrot.slane %v550, 2
      %v729 = vsel %vm726, %v727, %v728
      %v730 = vrot.slane %v551, 2
      %v731 = vsel %vm726, %v728, %v730
      %v732 = vrot.slane %v552, 2
      %v733 = vrot.slane %v553, 2
      %v734 = vsel %vm726, %v732, %v733
      %v735 = vrot.slane %v554, 2
      %v736 = vsel %vm726, %v733, %v735
      %v737 = vrot.slane %v555, 2
      %v738 = vrot.slane %v556, 2
      %v739 = vsel %vm726, %v737, %v738
      %v740 = vrot.slane %v557, 2
      %v741 = vsel %vm726, %v738, %v740
      %v742 = vrot.slane %v558, 2
      %v743 = vrot.slane %v559, 2
      %v744 = vsel %vm726, %v742, %v743
      %v745 = vrot.slane %v560, 2
      %v746 = vsel %vm726, %v743, %v745
      %v747 = vrot.slane %v561, 2
      %v748 = vrot.slane %v562, 2
      %v749 = vsel %vm726, %v747, %v748
      %v750 = vrot.slane %v563, 2
      %v751 = vsel %vm726, %v748, %v750
      %v752 = vrot.slane %v564, 2
      %v753 = vrot.slane %v565, 2
      %v754 = vsel %vm726, %v752, %v753
      %v755 = vrot.slane %v566, 2
      %v756 = vsel %vm726, %v753, %v755
      %v757 = vrot.slane %v567, 2
      %v758 = vrot.slane %v568, 2
      %v759 = vsel %vm726, %v757, %v758
      %v760 = vrot.slane %v569, 2
      %v761 = vsel %vm726, %v758, %v760
      %v762 = vrot.slane %v570, 2
      %v763 = vrot.slane %v571, 2
      %v764 = vsel %vm726, %v762, %v763
      %v765 = vrot.slane %v572, 2
      %v766 = vsel %vm726, %v763, %v765
      %v767 = vrot.slane %v573, 2
      %v768 = vrot.slane %v574, 2
      %v769 = vsel %vm726, %v767, %v768
      %v770 = vrot.slane %v575, 2
      %v771 = vsel %vm726, %v768, %v770
      %v772 = vrot.slane %v576, 2
      %v773 = vrot.slane %v577, 2
      %v774 = vsel %vm726, %v772, %v773
      %v775 = vrot.slane %v578, 2
      %v776 = vsel %vm726, %v773, %v775
      %777 = vrot.lane.b32.xlu0 %v729, 8
      %v778 = vpop.permute.xlu0 %777
      %779 = vrot.lane.b32.xlu0 %v731, 8
      %v780 = vpop.permute.xlu0 %779
      %781 = vrot.lane.b32.xlu0 %v734, 8
      %v782 = vpop.permute.xlu0 %781
      %783 = vrot.lane.b32.xlu0 %v736, 8
      %v784 = vpop.permute.xlu0 %783
      %785 = vrot.lane.b32.xlu0 %v739, 8
      %v786 = vpop.permute.xlu0 %785
      %787 = vrot.lane.b32.xlu0 %v741, 8
      %v788 = vpop.permute.xlu0 %787
      %789 = vrot.lane.b32.xlu0 %v744, 8
      %v790 = vpop.permute.xlu0 %789
      %791 = vrot.lane.b32.xlu0 %v746, 8
      %v792 = vpop.permute.xlu0 %791
      %793 = vrot.lane.b32.xlu0 %v749, 8
      %v794 = vpop.permute.xlu0 %793
      %795 = vrot.lane.b32.xlu0 %v751, 8
      %v796 = vpop.permute.xlu0 %795
      %797 = vrot.lane.b32.xlu0 %v754, 8
      %v798 = vpop.permute.xlu0 %797
      %799 = vrot.lane.b32.xlu0 %v756, 8
      %v800 = vpop.permute.xlu0 %799
      %801 = vrot.lane.b32.xlu0 %v759, 8
      %v802 = vpop.permute.xlu0 %801
      %803 = vrot.lane.b32.xlu0 %v761, 8
      %v804 = vpop.permute.xlu0 %803
      %805 = vrot.lane.b32.xlu0 %v764, 8
      %v806 = vpop.permute.xlu0 %805
      %807 = vrot.lane.b32.xlu0 %v766, 8
      %v808 = vpop.permute.xlu0 %807
      %809 = vrot.lane.b32.xlu0 %v769, 8
      %v810 = vpop.permute.xlu0 %809
      %811 = vrot.lane.b32.xlu0 %v771, 8
      %v812 = vpop.permute.xlu0 %811
      %813 = vrot.lane.b32.xlu0 %v774, 8
      %v814 = vpop.permute.xlu0 %813
      %815 = vrot.lane.b32.xlu0 %v776, 8
      %v816 = vpop.permute.xlu0 %815
      %v837 = vsel %vm499, %v549, %v667
      %v838 = vsel %vm499, %v550, %v669
      %v839 = vsel %vm499, %v552, %v671
      %v840 = vsel %vm499, %v553, %v673
      %v841 = vsel %vm499, %v555, %v675
      %v842 = vsel %vm499, %v556, %v677
      %v843 = vsel %vm499, %v558, %v679
      %v844 = vsel %vm499, %v559, %v681
      %v845 = vsel %vm499, %v561, %v683
      %v846 = vsel %vm499, %v562, %v685
      %v847 = vsel %vm499, %v564, %v687
      %v848 = vsel %vm499, %v565, %v689
      %v849 = vsel %vm499, %v567, %v691
      %v850 = vsel %vm499, %v568, %v693
      %v851 = vsel %vm499, %v570, %v695
      %v852 = vsel %vm499, %v571, %v697
      %v853 = vsel %vm499, %v573, %v699
      %v854 = vsel %vm499, %v574, %v701
      %v855 = vsel %vm499, %v576, %v703
      %v856 = vsel %vm499, %v577, %v705
      %vm857 = vcmask 64512
      %v858 = vsel %vm857, %v837, %v778
      %v859 = vsel %vm857, %v838, %v780
      %v860 = vsel %vm857, %v839, %v782
      %v861 = vsel %vm857, %v840, %v784
      %v862 = vsel %vm857, %v841, %v786
      %v863 = vsel %vm857, %v842, %v788
      %v864 = vsel %vm857, %v843, %v790
      %v865 = vsel %vm857, %v844, %v792
      %v866 = vsel %vm857, %v845, %v794
      %v867 = vsel %vm857, %v846, %v796
      %v868 = vsel %vm857, %v847, %v798
      %v869 = vsel %vm857, %v848, %v800
      %v870 = vsel %vm857, %v849, %v802
      %v871 = vsel %vm857, %v850, %v804
      %v872 = vsel %vm857, %v851, %v806
      %v873 = vsel %vm857, %v852, %v808
      %v874 = vsel %vm857, %v853, %v810
      %v875 = vsel %vm857, %v854, %v812
      %v876 = vsel %vm857, %v855, %v814
      %v877 = vsel %vm857, %v856, %v816
      %v881 = vrot.slane %v579, 1
      %v882 = vrot.slane %v580, 1
      %v883 = vsel %vm615, %v881, %v882
      %v884 = vrot.slane %v581, 1
      %v885 = vsel %vm615, %v882, %v884
      %886 = vrot.lane.b32.xlu0 %v883, 4
      %v887 = vpop.permute.xlu0 %886
      %888 = vrot.lane.b32.xlu0 %v885, 4
      %v889 = vpop.permute.xlu0 %888
      %v892 = vrot.slane %v579, 2
      %v893 = vrot.slane %v580, 2
      %v894 = vsel %vm726, %v892, %v893
      %v895 = vrot.slane %v581, 2
      %v896 = vsel %vm726, %v893, %v895
      %897 = vrot.lane.b32.xlu0 %v894, 8
      %v898 = vpop.permute.xlu0 %897
      %899 = vrot.lane.b32.xlu0 %v896, 8
      %v900 = vpop.permute.xlu0 %899
      %v903 = vsel %vm499, %v579, %v887
      %v904 = vsel %vm499, %v580, %v889
      %v905 = vsel %vm857, %v903, %v898
      %v906 = vsel %vm857, %v904, %v900
      %v910 = vrot.slane %v582, 1
      %v911 = vrot.slane %v583, 1
      %v912 = vsel %vm615, %v910, %v911
      %v913 = vrot.slane %v584, 1
      %v914 = vsel %vm615, %v911, %v913
      %915 = vrot.lane.b32.xlu0 %v912, 4
      %v916 = vpop.permute.xlu0 %915
      %917 = vrot.lane.b32.xlu0 %v914, 4
      %v918 = vpop.permute.xlu0 %917
      %v921 = vrot.slane %v582, 2
      %v922 = vrot.slane %v583, 2
      %v923 = vsel %vm726, %v921, %v922
      %v924 = vrot.slane %v584, 2
      %v925 = vsel %vm726, %v922, %v924
      %926 = vrot.lane.b32.xlu0 %v923, 8
      %v927 = vpop.permute.xlu0 %926
      %928 = vrot.lane.b32.xlu0 %v925, 8
      %v929 = vpop.permute.xlu0 %928
      %v932 = vsel %vm499, %v582, %v916
      %v933 = vsel %vm499, %v583, %v918
      %v934 = vsel %vm857, %v932, %v927
      %v935 = vsel %vm857, %v933, %v929
      %956 = vrot.lane.b32.xlu0 %v860, 12
      %v957 = vpop.permute.xlu0 %956
      %958 = vrot.lane.b32.xlu0 %v861, 12
      %v959 = vpop.permute.xlu0 %958
      %960 = vrot.lane.b32.xlu0 %v862, 12
      %v961 = vpop.permute.xlu0 %960
      %962 = vrot.lane.b32.xlu0 %v863, 12
      %v963 = vpop.permute.xlu0 %962
      %964 = vrot.lane.b32.xlu0 %v864, 12
      %v965 = vpop.permute.xlu0 %964
      %966 = vrot.lane.b32.xlu0 %v865, 12
      %v967 = vpop.permute.xlu0 %966
      %968 = vrot.lane.b32.xlu0 %v866, 12
      %v969 = vpop.permute.xlu0 %968
      %970 = vrot.lane.b32.xlu0 %v867, 12
      %v971 = vpop.permute.xlu0 %970
      %972 = vrot.lane.b32.xlu0 %v868, 12
      %v973 = vpop.permute.xlu0 %972
      %974 = vrot.lane.b32.xlu0 %v869, 12
      %v975 = vpop.permute.xlu0 %974
      %976 = vrot.lane.b32.xlu0 %v870, 12
      %v977 = vpop.permute.xlu0 %976
      %978 = vrot.lane.b32.xlu0 %v871, 12
      %v979 = vpop.permute.xlu0 %978
      %980 = vrot.lane.b32.xlu0 %v872, 12
      %v981 = vpop.permute.xlu0 %980
      %982 = vrot.lane.b32.xlu0 %v873, 12
      %v983 = vpop.permute.xlu0 %982
      %984 = vrot.lane.b32.xlu0 %v874, 12
      %v985 = vpop.permute.xlu0 %984
      %986 = vrot.lane.b32.xlu0 %v875, 12
      %v987 = vpop.permute.xlu0 %986
      %988 = vrot.lane.b32.xlu0 %v876, 12
      %v989 = vpop.permute.xlu0 %988
      %990 = vrot.lane.b32.xlu0 %v877, 12
      %v991 = vpop.permute.xlu0 %990
      %992 = vrot.lane.b32.xlu0 %v905, 12
      %v993 = vpop.permute.xlu0 %992
      %994 = vrot.lane.b32.xlu0 %v906, 12
      %v995 = vpop.permute.xlu0 %994
      %1018 = vrot.lane.b32.xlu0 %v862, 24
      %v1019 = vpop.permute.xlu0 %1018
      %1020 = vrot.lane.b32.xlu0 %v863, 24
      %v1021 = vpop.permute.xlu0 %1020
      %1022 = vrot.lane.b32.xlu0 %v864, 24
      %v1023 = vpop.permute.xlu0 %1022
      %1024 = vrot.lane.b32.xlu0 %v865, 24
      %v1025 = vpop.permute.xlu0 %1024
      %1026 = vrot.lane.b32.xlu0 %v866, 24
      %v1027 = vpop.permute.xlu0 %1026
      %1028 = vrot.lane.b32.xlu0 %v867, 24
      %v1029 = vpop.permute.xlu0 %1028
      %1030 = vrot.lane.b32.xlu0 %v868, 24
      %v1031 = vpop.permute.xlu0 %1030
      %1032 = vrot.lane.b32.xlu0 %v869, 24
      %v1033 = vpop.permute.xlu0 %1032
      %1034 = vrot.lane.b32.xlu0 %v870, 24
      %v1035 = vpop.permute.xlu0 %1034
      %1036 = vrot.lane.b32.xlu0 %v871, 24
      %v1037 = vpop.permute.xlu0 %1036
      %1038 = vrot.lane.b32.xlu0 %v872, 24
      %v1039 = vpop.permute.xlu0 %1038
      %1040 = vrot.lane.b32.xlu0 %v873, 24
      %v1041 = vpop.permute.xlu0 %1040
      %1042 = vrot.lane.b32.xlu0 %v874, 24
      %v1043 = vpop.permute.xlu0 %1042
      %1044 = vrot.lane.b32.xlu0 %v875, 24
      %v1045 = vpop.permute.xlu0 %1044
      %1046 = vrot.lane.b32.xlu0 %v876, 24
      %v1047 = vpop.permute.xlu0 %1046
      %1048 = vrot.lane.b32.xlu0 %v877, 24
      %v1049 = vpop.permute.xlu0 %1048
      %1050 = vrot.lane.b32.xlu0 %v905, 24
      %v1051 = vpop.permute.xlu0 %1050
      %1052 = vrot.lane.b32.xlu0 %v906, 24
      %v1053 = vpop.permute.xlu0 %1052
      %1054 = vrot.lane.b32.xlu0 %v934, 24
      %v1055 = vpop.permute.xlu0 %1054
      %1056 = vrot.lane.b32.xlu0 %v935, 24
      %v1057 = vpop.permute.xlu0 %1056
      %vm1078 = vcmask 97280
      %v1079 = vsel %vm1078, %v858, %v957
      %v1080 = vsel %vm1078, %v859, %v959
      %v1081 = vsel %vm1078, %v860, %v961
      %v1082 = vsel %vm1078, %v861, %v963
      %v1083 = vsel %vm1078, %v862, %v965
      %v1084 = vsel %vm1078, %v863, %v967
      %v1085 = vsel %vm1078, %v864, %v969
      %v1086 = vsel %vm1078, %v865, %v971
      %v1087 = vsel %vm1078, %v866, %v973
      %v1088 = vsel %vm1078, %v867, %v975
      %v1089 = vsel %vm1078, %v868, %v977
      %v1090 = vsel %vm1078, %v869, %v979
      %v1091 = vsel %vm1078, %v870, %v981
      %v1092 = vsel %vm1078, %v871, %v983
      %v1093 = vsel %vm1078, %v872, %v985
      %v1094 = vsel %vm1078, %v873, %v987
      %v1095 = vsel %vm1078, %v874, %v989
      %v1096 = vsel %vm1078, %v875, %v991
      %v1097 = vsel %vm1078, %v876, %v993
      %v1098 = vsel %vm1078, %v877, %v995
      %vm1099 = vcmask 195584
      %v1100 = vsel %vm1099, %v1079, %v1019
      %v1101 = vsel %vm1099, %v1080, %v1021
      %v1102 = vsel %vm1099, %v1081, %v1023
      %v1103 = vsel %vm1099, %v1082, %v1025
      %v1104 = vsel %vm1099, %v1083, %v1027
      %v1105 = vsel %vm1099, %v1084, %v1029
      %v1106 = vsel %vm1099, %v1085, %v1031
      %v1107 = vsel %vm1099, %v1086, %v1033
      %v1108 = vsel %vm1099, %v1087, %v1035
      %v1109 = vsel %vm1099, %v1088, %v1037
      %v1110 = vsel %vm1099, %v1089, %v1039
      %v1111 = vsel %vm1099, %v1090, %v1041
      %v1112 = vsel %vm1099, %v1091, %v1043
      %v1113 = vsel %vm1099, %v1092, %v1045
      %v1114 = vsel %vm1099, %v1093, %v1047
      %v1115 = vsel %vm1099, %v1094, %v1049
      %v1116 = vsel %vm1099, %v1095, %v1051
      %v1117 = vsel %vm1099, %v1096, %v1053
      %v1118 = vsel %vm1099, %v1097, %v1055
      %v1119 = vsel %vm1099, %v1098, %v1057
      %v1120 = vld [vmem:[%s3] sm:$0xff]
      %v1121 = vld [vmem:[%s3 + $0x8] sm:$0xff]
      %v1122 = vld [vmem:[%s3 + $0x10] sm:$0xff]
      %v1123 = vld [vmem:[%s3 + $0x18] sm:$0xff]
      %v1124 = vld [vmem:[%s3 + $0x20] sm:$0xf]
      %v1125 = vld [vmem:[%s4] sm:$0x1]
      %v1127 = vperm.slane %v1125, 0
      %vm1129 = vcmask 293888
      %v1131 = vsel %vm1129, %v1100, 0
      %v1134 = vsel %vm1129, %v1101, 0
      %v1137 = vsel %vm1129, %v1102, 0
      %v1140 = vsel %vm1129, %v1103, 0
      %v1143 = vsel %vm1129, %v1104, 0
      %v1146 = vsel %vm1129, %v1105, 0
      %v1149 = vsel %vm1129, %v1106, 0
      %v1152 = vsel %vm1129, %v1107, 0
      %v1155 = vsel %vm1129, %v1108, 0
      %v1158 = vsel %vm1129, %v1109, 0
      %v1161 = vsel %vm1129, %v1110, 0
      %v1164 = vsel %vm1129, %v1111, 0
      %v1167 = vsel %vm1129, %v1112, 0
      %v1170 = vsel %vm1129, %v1113, 0
      %v1173 = vsel %vm1129, %v1114, 0
      %v1176 = vsel %vm1129, %v1115, 0
      %v1179 = vsel %vm1129, %v1116, 0
      %v1182 = vsel %vm1129, %v1117, 0
      %v1185 = vsel %vm1129, %v1118, 0
      %v1188 = vsel %vm1129, %v1119, 0
      %vm1190 = vcmask 1043456
      %v1192 = vsel %vm1190, %v1124, 0
      %1194 = vmatpush.msra.mxu0 0.0
      %1195 = vmatpush.msra.mxu0 0.0
      %1196 = vmatpush.msra.mxu0 0.0
      %1197 = vmatpush.msra.mxu0 0.0
      %1198 = vmatpush.msra.mxu0 0.0
      %1199 = vmatpush.msra.mxu0 0.0
      %1200 = vmatpush.msra.mxu0 0.0
      %1201 = vmatpush.msra.mxu0 0.0
      %1202 = vmatpush.msra.mxu0 0.0
      %1203 = vmatpush.msra.mxu0 0.0
      %1204 = vmatpush.msra.mxu0 0.0
      %1205 = vmatpush.msra.mxu0 %v1192
      %1206 = vmatpush.msra.mxu0 %v1123
      %1207 = vmatpush.msra.mxu0 %v1122
      %1208 = vmatpush.msra.mxu0 %v1121
      %1209 = vmatpush.msra.mxu0 %v1120
      %1210 = vmatmul.f32.gmra.mxu0 %v1131
      %v1211 = vpop.f32.mrf.mxu0
      %v1212 = vadd.f32 %v1127, %v1211
      %1213 = vmatmul.f32.gmra.mxu0 %v1134
      %v1214 = vpop.f32.mrf.mxu0
      %v1215 = vadd.f32 %v1127, %v1214
      %1216 = vmatmul.f32.gmra.mxu0 %v1137
      %v1217 = vpop.f32.mrf.mxu0
      %v1218 = vadd.f32 %v1127, %v1217
      %1219 = vmatmul.f32.gmra.mxu0 %v1140
      %v1220 = vpop.f32.mrf.mxu0
      %v1221 = vadd.f32 %v1127, %v1220
      %1222 = vmatmul.f32.gmra.mxu0 %v1143
      %v1223 = vpop.f32.mrf.mxu0
      %v1224 = vadd.f32 %v1127, %v1223
      %1225 = vmatmul.f32.gmra.mxu0 %v1146
      %v1226 = vpop.f32.mrf.mxu0
      %v1227 = vadd.f32 %v1127, %v1226
      %1228 = vmatmul.f32.gmra.mxu0 %v1149
      %v1229 = vpop.f32.mrf.mxu0
      %v1230 = vadd.f32 %v1127, %v1229
      %1231 = vmatmul.f32.gmra.mxu0 %v1152
      %v1232 = vpop.f32.mrf.mxu0
      %v1233 = vadd.f32 %v1127, %v1232
      %1234 = vmatmul.f32.gmra.mxu0 %v1155
      %v1235 = vpop.f32.mrf.mxu0
      %v1236 = vadd.f32 %v1127, %v1235
      %1237 = vmatmul.f32.gmra.mxu0 %v1158
      %v1238 = vpop.f32.mrf.mxu0
      %v1239 = vadd.f32 %v1127, %v1238
      %1240 = vmatmul.f32.gmra.mxu0 %v1161
      %v1241 = vpop.f32.mrf.mxu0
      %v1242 = vadd.f32 %v1127, %v1241
      %1243 = vmatmul.f32.gmra.mxu0 %v1164
      %v1244 = vpop.f32.mrf.mxu0
      %v1245 = vadd.f32 %v1127, %v1244
      %1246 = vmatmul.f32.gmra.mxu0 %v1167
      %v1247 = vpop.f32.mrf.mxu0
      %v1248 = vadd.f32 %v1127, %v1247
      %1249 = vmatmul.f32.gmra.mxu0 %v1170
      %v1250 = vpop.f32.mrf.mxu0
      %v1251 = vadd.f32 %v1127, %v1250
      %1252 = vmatmul.f32.gmra.mxu0 %v1173
      %v1253 = vpop.f32.mrf.mxu0
      %v1254 = vadd.f32 %v1127, %v1253
      %1255 = vmatmul.f32.gmra.mxu0 %v1176
      %v1256 = vpop.f32.mrf.mxu0
      %v1257 = vadd.f32 %v1127, %v1256
      %1258 = vmatmul.f32.gmra.mxu0 %v1179
      %v1259 = vpop.f32.mrf.mxu0
      %v1260 = vadd.f32 %v1127, %v1259
      %1261 = vmatmul.f32.gmra.mxu0 %v1182
      %v1262 = vpop.f32.mrf.mxu0
      %v1263 = vadd.f32 %v1127, %v1262
      %1264 = vmatmul.f32.gmra.mxu0 %v1185
      %v1265 = vpop.f32.mrf.mxu0
      %v1266 = vadd.f32 %v1127, %v1265
      %1267 = vmatmul.f32.gmra.mxu0 %v1188
      %v1268 = vpop.f32.mrf.mxu0
      %v1269 = vadd.f32 %v1127, %v1268
      %1270 = vdwg.mxu0
      %v1271 = vmax.f32 %v1212, 0.0
      %v1272 = vmax.f32 %v1215, 0.0
      %v1273 = vmax.f32 %v1218, 0.0
      %v1274 = vmax.f32 %v1221, 0.0
      %v1275 = vmax.f32 %v1224, 0.0
      %v1276 = vmax.f32 %v1227, 0.0
      %v1277 = vmax.f32 %v1230, 0.0
      %v1278 = vmax.f32 %v1233, 0.0
      %v1279 = vmax.f32 %v1236, 0.0
      %v1280 = vmax.f32 %v1239, 0.0
      %v1281 = vmax.f32 %v1242, 0.0
      %v1282 = vmax.f32 %v1245, 0.0
      %v1283 = vmax.f32 %v1248, 0.0
      %v1284 = vmax.f32 %v1251, 0.0
      %v1285 = vmax.f32 %v1254, 0.0
      %v1286 = vmax.f32 %v1257, 0.0
      %v1287 = vmax.f32 %v1260, 0.0
      %v1288 = vmax.f32 %v1263, 0.0
      %v1289 = vmax.f32 %v1266, 0.0
      %v1290 = vmax.f32 %v1269, 0.0
      %vm1291 = vcmask 57344
      %1292 = vst.msk [vmem:[#allocation3 + $0x7] sm:$0x1] %vm1291, 0.0
      %1293 = vst.msk [vmem:[#allocation3 + $0x27] sm:$0x1] %vm1291, 0.0
      %1294 = vst.msk [vmem:[#allocation3 + $0x47] sm:$0x1] %vm1291, 0.0
      %1295 = vst.msk [vmem:[#allocation3 + $0x67] sm:$0x1] %vm1291, 0.0
      %1296 = vst.msk [vmem:[#allocation3 + $0x87] sm:$0x1] %vm1291, 0.0
      %1297 = vst.msk [vmem:[#allocation3 + $0xa7] sm:$0x1] %vm1291, 0.0
      %1298 = vst.msk [vmem:[#allocation3 + $0xc7] sm:$0x1] %vm1291, 0.0
      %1299 = vst.msk [vmem:[#allocation3 + $0xe7] sm:$0x1] %vm1291, 0.0
      %1300 = vst.msk [vmem:[#allocation3 + $0x107] sm:$0x1] %vm1291, 0.0
      %1301 = vst.msk [vmem:[#allocation3 + $0x127] sm:$0x1] %vm1291, 0.0
      %1302 = vst.msk [vmem:[#allocation3 + $0x18] sm:$0x1] %vm1291, 0.0
      %1303 = vst.msk [vmem:[#allocation3 + $0x38] sm:$0x1] %vm1291, 0.0
      %1304 = vst.msk [vmem:[#allocation3 + $0x58] sm:$0x1] %vm1291, 0.0
      %1305 = vst.msk [vmem:[#allocation3 + $0x78] sm:$0x1] %vm1291, 0.0
      %1306 = vst.msk [vmem:[#allocation3 + $0x98] sm:$0x1] %vm1291, 0.0
      %1307 = vst.msk [vmem:[#allocation3 + $0xb8] sm:$0x1] %vm1291, 0.0
      %1308 = vst.msk [vmem:[#allocation3 + $0xd8] sm:$0x1] %vm1291, 0.0
      %1309 = vst.msk [vmem:[#allocation3 + $0xf8] sm:$0x1] %vm1291, 0.0
      %1310 = vst.msk [vmem:[#allocation3 + $0x118] sm:$0x1] %vm1291, 0.0
      %1311 = vst.msk [vmem:[#allocation3 + $0x138] sm:$0x1] %vm1291, 0.0
      %1312 = vst.msk [vmem:[#allocation3 + $0x8] sm:$0xff] %vm857, %v1271
      %1313 = vst.msk [vmem:[#allocation3 + $0x10] sm:$0xff] %vm857, %v1272
      %1314 = vst.msk [vmem:[#allocation3 + $0x28] sm:$0xff] %vm857, %v1273
      %1315 = vst.msk [vmem:[#allocation3 + $0x30] sm:$0xff] %vm857, %v1274
      %1316 = vst.msk [vmem:[#allocation3 + $0x48] sm:$0xff] %vm857, %v1275
      %1317 = vst.msk [vmem:[#allocation3 + $0x50] sm:$0xff] %vm857, %v1276
      %1318 = vst.msk [vmem:[#allocation3 + $0x68] sm:$0xff] %vm857, %v1277
      %1319 = vst.msk [vmem:[#allocation3 + $0x70] sm:$0xff] %vm857, %v1278
      %1320 = vst.msk [vmem:[#allocation3 + $0x88] sm:$0xff] %vm857, %v1279
      %1321 = vst.msk [vmem:[#allocation3 + $0x90] sm:$0xff] %vm857, %v1280
      %1322 = vst.msk [vmem:[#allocation3 + $0xa8] sm:$0xff] %vm857, %v1281
      %1323 = vst.msk [vmem:[#allocation3 + $0xb0] sm:$0xff] %vm857, %v1282
      %1324 = vst.msk [vmem:[#allocation3 + $0xc8] sm:$0xff] %vm857, %v1283
      %1325 = vst.msk [vmem:[#allocation3 + $0xd0] sm:$0xff] %vm857, %v1284
      %1326 = vst.msk [vmem:[#allocation3 + $0xe8] sm:$0xff] %vm857, %v1285
      %1327 = vst.msk [vmem:[#allocation3 + $0xf0] sm:$0xff] %vm857, %v1286
      %1328 = vst.msk [vmem:[#allocation3 + $0x108] sm:$0xff] %vm857, %v1287
      %1329 = vst.msk [vmem:[#allocation3 + $0x110] sm:$0xff] %vm857, %v1288
      %1330 = vst.msk [vmem:[#allocation3 + $0x128] sm:$0xff] %vm857, %v1289
      %1331 = vst.msk [vmem:[#allocation3 + $0x130] sm:$0xff] %vm857, %v1290
      // Predicated region
      $region57: #{double_conv.1} parent=47 // pred_check
        %p1332 = pneg %p533
      $region58: #{double_conv.1} parent=47 // pred_check_branch
        %1334 = sbr.rel (%p1332) target = $region60
      $region59: #{double_conv.1} parent=47 // pred_region
        %1335 = vst.msk [vmem:[#allocation3 + $0x7] sm:$0xff] %vm857, 0.0
        %1336 = vst.msk [vmem:[#allocation3 + $0xf] sm:$0xff] %vm857, 0.0
        %vm1337 = vcmask 58368
        %1338 = vst.msk [vmem:[#allocation3 + $0x17] sm:$0x3] %vm1337, 0.0
      $region60: #{double_conv.1} parent=47 // pred_fallthru
        _
      // Predicated region
      $region61: #{double_conv.1} parent=47 // pred_check
        %p1339 = pneg %p541
      $region62: #{double_conv.1} parent=47 // pred_check_branch
        %1341 = sbr.rel (%p1339) target = $region64
      $region63: #{double_conv.1} parent=47 // pred_region
        %s1342 = scalar_lea.vmem [#allocation3], 288
        %1343 = vst.msk [vmem:[%s1342 + $0x7] sm:$0xff] %vm857, 0.0
        %1344 = vst.msk [vmem:[%s1342 + $0xf] sm:$0xff] %vm857, 0.0
        %vm1345 = vcmask 58368
        %1346 = vst.msk [vmem:[%s1342 + $0x17] sm:$0x3] %vm1345, 0.0
      $region64: #{double_conv.1} parent=47 // pred_fallthru
        _
      %v1347 = vld [vmem:[#allocation3 + $0x7] sm:$0xff]
      %v1348 = vld [vmem:[#allocation3 + $0xf] sm:$0xff]
      %v1349 = vld [vmem:[#allocation3 + $0x17] sm:$0x3]
      %v1350 = vld [vmem:[#allocation3 + $0x27] sm:$0xff]
      %v1351 = vld [vmem:[#allocation3 + $0x2f] sm:$0xff]
      %v1352 = vld [vmem:[#allocation3 + $0x37] sm:$0x3]
      %v1353 = vld [vmem:[#allocation3 + $0x47] sm:$0xff]
      %v1354 = vld [vmem:[#allocation3 + $0x4f] sm:$0xff]
      %v1355 = vld [vmem:[#allocation3 + $0x57] sm:$0x3]
      %v1356 = vld [vmem:[#allocation3 + $0x67] sm:$0xff]
      %v1357 = vld [vmem:[#allocation3 + $0x6f] sm:$0xff]
      %v1358 = vld [vmem:[#allocation3 + $0x77] sm:$0x3]
      %v1359 = vld [vmem:[#allocation3 + $0x87] sm:$0xff]
      %v1360 = vld [vmem:[#allocation3 + $0x8f] sm:$0xff]
      %v1361 = vld [vmem:[#allocation3 + $0x97] sm:$0x3]
      %v1362 = vld [vmem:[#allocation3 + $0xa7] sm:$0xff]
      %v1363 = vld [vmem:[#allocation3 + $0xaf] sm:$0xff]
      %v1364 = vld [vmem:[#allocation3 + $0xb7] sm:$0x3]
      %v1365 = vld [vmem:[#allocation3 + $0xc7] sm:$0xff]
      %v1366 = vld [vmem:[#allocation3 + $0xcf] sm:$0xff]
      %v1367 = vld [vmem:[#allocation3 + $0xd7] sm:$0x3]
      %v1368 = vld [vmem:[#allocation3 + $0xe7] sm:$0xff]
      %v1369 = vld [vmem:[#allocation3 + $0xef] sm:$0xff]
      %v1370 = vld [vmem:[#allocation3 + $0xf7] sm:$0x3]
      %v1371 = vld [vmem:[#allocation3 + $0x107] sm:$0xff]
      %v1372 = vld [vmem:[#allocation3 + $0x10f] sm:$0xff]
      %v1373 = vld [vmem:[#allocation3 + $0x117] sm:$0x3]
      %v1374 = vld [vmem:[#allocation3 + $0x127] sm:$0xff]
      %v1375 = vld [vmem:[#allocation3 + $0x12f] sm:$0xff]
      %v1376 = vld [vmem:[#allocation3 + $0x137] sm:$0x3]
      %v1401 = vrot.slane %v1347, 1
      %v1402 = vrot.slane %v1348, 1
      %v1403 = vsel %vm615, %v1401, %v1402
      %v1404 = vrot.slane %v1349, 1
      %v1405 = vsel %vm615, %v1402, %v1404
      %v1406 = vrot.slane %v1350, 1
      %v1407 = vrot.slane %v1351, 1
      %v1408 = vsel %vm615, %v1406, %v1407
      %v1409 = vrot.slane %v1352, 1
      %v1410 = vsel %vm615, %v1407, %v1409
      %v1411 = vrot.slane %v1353, 1
      %v1412 = vrot.slane %v1354, 1
      %v1413 = vsel %vm615, %v1411, %v1412
      %v1414 = vrot.slane %v1355, 1
      %v1415 = vsel %vm615, %v1412, %v1414
      %v1416 = vrot.slane %v1356, 1
      %v1417 = vrot.slane %v1357, 1
      %v1418 = vsel %vm615, %v1416, %v1417
      %v1419 = vrot.slane %v1358, 1
      %v1420 = vsel %vm615, %v1417, %v1419
      %v1421 = vrot.slane %v1359, 1
      %v1422 = vrot.slane %v1360, 1
      %v1423 = vsel %vm615, %v1421, %v1422
      %v1424 = vrot.slane %v1361, 1
      %v1425 = vsel %vm615, %v1422, %v1424
      %v1426 = vrot.slane %v1362, 1
      %v1427 = vrot.slane %v1363, 1
      %v1428 = vsel %vm615, %v1426, %v1427
      %v1429 = vrot.slane %v1364, 1
      %v1430 = vsel %vm615, %v1427, %v1429
      %v1431 = vrot.slane %v1365, 1
      %v1432 = vrot.slane %v1366, 1
      %v1433 = vsel %vm615, %v1431, %v1432
      %v1434 = vrot.slane %v1367, 1
      %v1435 = vsel %vm615, %v1432, %v1434
      %v1436 = vrot.slane %v1368, 1
      %v1437 = vrot.slane %v1369, 1
      %v1438 = vsel %vm615, %v1436, %v1437
      %v1439 = vrot.slane %v1370, 1
      %v1440 = vsel %vm615, %v1437, %v1439
      %1441 = vrot.lane.b32.xlu0 %v1403, 8
      %v1442 = vpop.permute.xlu0 %1441
      %1443 = vrot.lane.b32.xlu0 %v1405, 8
      %v1444 = vpop.permute.xlu0 %1443
      %1445 = vrot.lane.b32.xlu0 %v1408, 8
      %v1446 = vpop.permute.xlu0 %1445
      %1447 = vrot.lane.b32.xlu0 %v1410, 8
      %v1448 = vpop.permute.xlu0 %1447
      %1449 = vrot.lane.b32.xlu0 %v1413, 8
      %v1450 = vpop.permute.xlu0 %1449
      %1451 = vrot.lane.b32.xlu0 %v1415, 8
      %v1452 = vpop.permute.xlu0 %1451
      %1453 = vrot.lane.b32.xlu0 %v1418, 8
      %v1454 = vpop.permute.xlu0 %1453
      %1455 = vrot.lane.b32.xlu0 %v1420, 8
      %v1456 = vpop.permute.xlu0 %1455
      %1457 = vrot.lane.b32.xlu0 %v1423, 8
      %v1458 = vpop.permute.xlu0 %1457
      %1459 = vrot.lane.b32.xlu0 %v1425, 8
      %v1460 = vpop.permute.xlu0 %1459
      %1461 = vrot.lane.b32.xlu0 %v1428, 8
      %v1462 = vpop.permute.xlu0 %1461
      %1463 = vrot.lane.b32.xlu0 %v1430, 8
      %v1464 = vpop.permute.xlu0 %1463
      %1465 = vrot.lane.b32.xlu0 %v1433, 8
      %v1466 = vpop.permute.xlu0 %1465
      %1467 = vrot.lane.b32.xlu0 %v1435, 8
      %v1468 = vpop.permute.xlu0 %1467
      %1469 = vrot.lane.b32.xlu0 %v1438, 8
      %v1470 = vpop.permute.xlu0 %1469
      %1471 = vrot.lane.b32.xlu0 %v1440, 8
      %v1472 = vpop.permute.xlu0 %1471
      %v1489 = vrot.slane %v1347, 2
      %v1490 = vrot.slane %v1348, 2
      %v1491 = vsel %vm726, %v1489, %v1490
      %v1492 = vrot.slane %v1349, 2
      %v1493 = vsel %vm726, %v1490, %v1492
      %v1494 = vrot.slane %v1350, 2
      %v1495 = vrot.slane %v1351, 2
      %v1496 = vsel %vm726, %v1494, %v1495
      %v1497 = vrot.slane %v1352, 2
      %v1498 = vsel %vm726, %v1495, %v1497
      %v1499 = vrot.slane %v1353, 2
      %v1500 = vrot.slane %v1354, 2
      %v1501 = vsel %vm726, %v1499, %v1500
      %v1502 = vrot.slane %v1355, 2
      %v1503 = vsel %vm726, %v1500, %v1502
      %v1504 = vrot.slane %v1356, 2
      %v1505 = vrot.slane %v1357, 2
      %v1506 = vsel %vm726, %v1504, %v1505
      %v1507 = vrot.slane %v1358, 2
      %v1508 = vsel %vm726, %v1505, %v1507
      %v1509 = vrot.slane %v1359, 2
      %v1510 = vrot.slane %v1360, 2
      %v1511 = vsel %vm726, %v1509, %v1510
      %v1512 = vrot.slane %v1361, 2
      %v1513 = vsel %vm726, %v1510, %v1512
      %v1514 = vrot.slane %v1362, 2
      %v1515 = vrot.slane %v1363, 2
      %v1516 = vsel %vm726, %v1514, %v1515
      %v1517 = vrot.slane %v1364, 2
      %v1518 = vsel %vm726, %v1515, %v1517
      %v1519 = vrot.slane %v1365, 2
      %v1520 = vrot.slane %v1366, 2
      %v1521 = vsel %vm726, %v1519, %v1520
      %v1522 = vrot.slane %v1367, 2
      %v1523 = vsel %vm726, %v1520, %v1522
      %v1524 = vrot.slane %v1368, 2
      %v1525 = vrot.slane %v1369, 2
      %v1526 = vsel %vm726, %v1524, %v1525
      %v1527 = vrot.slane %v1370, 2
      %v1528 = vsel %vm726, %v1525, %v1527
      %1529 = vrot.lane.b32.xlu0 %v1491, 16
      %v1530 = vpop.permute.xlu0 %1529
      %1531 = vrot.lane.b32.xlu0 %v1493, 16
      %v1532 = vpop.permute.xlu0 %1531
      %1533 = vrot.lane.b32.xlu0 %v1496, 16
      %v1534 = vpop.permute.xlu0 %1533
      %1535 = vrot.lane.b32.xlu0 %v1498, 16
      %v1536 = vpop.permute.xlu0 %1535
      %1537 = vrot.lane.b32.xlu0 %v1501, 16
      %v1538 = vpop.permute.xlu0 %1537
      %1539 = vrot.lane.b32.xlu0 %v1503, 16
      %v1540 = vpop.permute.xlu0 %1539
      %1541 = vrot.lane.b32.xlu0 %v1506, 16
      %v1542 = vpop.permute.xlu0 %1541
      %1543 = vrot.lane.b32.xlu0 %v1508, 16
      %v1544 = vpop.permute.xlu0 %1543
      %1545 = vrot.lane.b32.xlu0 %v1511, 16
      %v1546 = vpop.permute.xlu0 %1545
      %1547 = vrot.lane.b32.xlu0 %v1513, 16
      %v1548 = vpop.permute.xlu0 %1547
      %1549 = vrot.lane.b32.xlu0 %v1516, 16
      %v1550 = vpop.permute.xlu0 %1549
      %1551 = vrot.lane.b32.xlu0 %v1518, 16
      %v1552 = vpop.permute.xlu0 %1551
      %1553 = vrot.lane.b32.xlu0 %v1521, 16
      %v1554 = vpop.permute.xlu0 %1553
      %1555 = vrot.lane.b32.xlu0 %v1523, 16
      %v1556 = vpop.permute.xlu0 %1555
      %1557 = vrot.lane.b32.xlu0 %v1526, 16
      %v1558 = vpop.permute.xlu0 %1557
      %1559 = vrot.lane.b32.xlu0 %v1528, 16
      %v1560 = vpop.permute.xlu0 %1559
      %v1577 = vsel %vm857, %v1347, %v1442
      %v1578 = vsel %vm857, %v1348, %v1444
      %v1579 = vsel %vm857, %v1350, %v1446
      %v1580 = vsel %vm857, %v1351, %v1448
      %v1581 = vsel %vm857, %v1353, %v1450
      %v1582 = vsel %vm857, %v1354, %v1452
      %v1583 = vsel %vm857, %v1356, %v1454
      %v1584 = vsel %vm857, %v1357, %v1456
      %v1585 = vsel %vm857, %v1359, %v1458
      %v1586 = vsel %vm857, %v1360, %v1460
      %v1587 = vsel %vm857, %v1362, %v1462
      %v1588 = vsel %vm857, %v1363, %v1464
      %v1589 = vsel %vm857, %v1365, %v1466
      %v1590 = vsel %vm857, %v1366, %v1468
      %v1591 = vsel %vm857, %v1368, %v1470
      %v1592 = vsel %vm857, %v1369, %v1472
      %vm1593 = vcmask 130048
      %v1594 = vsel %vm1593, %v1577, %v1530
      %v1595 = vsel %vm1593, %v1578, %v1532
      %v1596 = vsel %vm1593, %v1579, %v1534
      %v1597 = vsel %vm1593, %v1580, %v1536
      %v1598 = vsel %vm1593, %v1581, %v1538
      %v1599 = vsel %vm1593, %v1582, %v1540
      %v1600 = vsel %vm1593, %v1583, %v1542
      %v1601 = vsel %vm1593, %v1584, %v1544
      %v1602 = vsel %vm1593, %v1585, %v1546
      %v1603 = vsel %vm1593, %v1586, %v1548
      %v1604 = vsel %vm1593, %v1587, %v1550
      %v1605 = vsel %vm1593, %v1588, %v1552
      %v1606 = vsel %vm1593, %v1589, %v1554
      %v1607 = vsel %vm1593, %v1590, %v1556
      %v1608 = vsel %vm1593, %v1591, %v1558
      %v1609 = vsel %vm1593, %v1592, %v1560
      %v1613 = vrot.slane %v1371, 1
      %v1614 = vrot.slane %v1372, 1
      %v1615 = vsel %vm615, %v1613, %v1614
      %v1616 = vrot.slane %v1373, 1
      %v1617 = vsel %vm615, %v1614, %v1616
      %1618 = vrot.lane.b32.xlu0 %v1615, 8
      %v1619 = vpop.permute.xlu0 %1618
      %1620 = vrot.lane.b32.xlu0 %v1617, 8
      %v1621 = vpop.permute.xlu0 %1620
      %v1624 = vrot.slane %v1371, 2
      %v1625 = vrot.slane %v1372, 2
      %v1626 = vsel %vm726, %v1624, %v1625
      %v1627 = vrot.slane %v1373, 2
      %v1628 = vsel %vm726, %v1625, %v1627
      %1629 = vrot.lane.b32.xlu0 %v1626, 16
      %v1630 = vpop.permute.xlu0 %1629
      %1631 = vrot.lane.b32.xlu0 %v1628, 16
      %v1632 = vpop.permute.xlu0 %1631
      %v1635 = vsel %vm857, %v1371, %v1619
      %v1636 = vsel %vm857, %v1372, %v1621
      %v1637 = vsel %vm1593, %v1635, %v1630
      %v1638 = vsel %vm1593, %v1636, %v1632
      %v1642 = vrot.slane %v1374, 1
      %v1643 = vrot.slane %v1375, 1
      %v1644 = vsel %vm615, %v1642, %v1643
      %v1645 = vrot.slane %v1376, 1
      %v1646 = vsel %vm615, %v1643, %v1645
      %1647 = vrot.lane.b32.xlu0 %v1644, 8
      %v1648 = vpop.permute.xlu0 %1647
      %1649 = vrot.lane.b32.xlu0 %v1646, 8
      %v1650 = vpop.permute.xlu0 %1649
      %v1653 = vrot.slane %v1374, 2
      %v1654 = vrot.slane %v1375, 2
      %v1655 = vsel %vm726, %v1653, %v1654
      %v1656 = vrot.slane %v1376, 2
      %v1657 = vsel %vm726, %v1654, %v1656
      %1658 = vrot.lane.b32.xlu0 %v1655, 16
      %v1659 = vpop.permute.xlu0 %1658
      %1660 = vrot.lane.b32.xlu0 %v1657, 16
      %v1661 = vpop.permute.xlu0 %1660
      %v1664 = vsel %vm857, %v1374, %v1648
      %v1665 = vsel %vm857, %v1375, %v1650
      %v1666 = vsel %vm1593, %v1664, %v1659
      %v1667 = vsel %vm1593, %v1665, %v1661
      %1684 = vrot.lane.b32.xlu0 %v1596, 24
      %v1685 = vpop.permute.xlu0 %1684
      %1686 = vrot.lane.b32.xlu0 %v1597, 24
      %v1687 = vpop.permute.xlu0 %1686
      %1688 = vrot.lane.b32.xlu0 %v1598, 24
      %v1689 = vpop.permute.xlu0 %1688
      %1690 = vrot.lane.b32.xlu0 %v1599, 24
      %v1691 = vpop.permute.xlu0 %1690
      %1692 = vrot.lane.b32.xlu0 %v1600, 24
      %v1693 = vpop.permute.xlu0 %1692
      %1694 = vrot.lane.b32.xlu0 %v1601, 24
      %v1695 = vpop.permute.xlu0 %1694
      %1696 = vrot.lane.b32.xlu0 %v1602, 24
      %v1697 = vpop.permute.xlu0 %1696
      %1698 = vrot.lane.b32.xlu0 %v1603, 24
      %v1699 = vpop.permute.xlu0 %1698
      %1700 = vrot.lane.b32.xlu0 %v1604, 24
      %v1701 = vpop.permute.xlu0 %1700
      %1702 = vrot.lane.b32.xlu0 %v1605, 24
      %v1703 = vpop.permute.xlu0 %1702
      %1704 = vrot.lane.b32.xlu0 %v1606, 24
      %v1705 = vpop.permute.xlu0 %1704
      %1706 = vrot.lane.b32.xlu0 %v1607, 24
      %v1707 = vpop.permute.xlu0 %1706
      %1708 = vrot.lane.b32.xlu0 %v1608, 24
      %v1709 = vpop.permute.xlu0 %1708
      %1710 = vrot.lane.b32.xlu0 %v1609, 24
      %v1711 = vpop.permute.xlu0 %1710
      %1712 = vrot.lane.b32.xlu0 %v1637, 24
      %v1713 = vpop.permute.xlu0 %1712
      %1714 = vrot.lane.b32.xlu0 %v1638, 24
      %v1715 = vpop.permute.xlu0 %1714
      %1734 = vrot.lane.b32.xlu0 %v1598, 48
      %v1735 = vpop.permute.xlu0 %1734
      %1736 = vrot.lane.b32.xlu0 %v1599, 48
      %v1737 = vpop.permute.xlu0 %1736
      %1738 = vrot.lane.b32.xlu0 %v1600, 48
      %v1739 = vpop.permute.xlu0 %1738
      %1740 = vrot.lane.b32.xlu0 %v1601, 48
      %v1741 = vpop.permute.xlu0 %1740
      %1742 = vrot.lane.b32.xlu0 %v1602, 48
      %v1743 = vpop.permute.xlu0 %1742
      %1744 = vrot.lane.b32.xlu0 %v1603, 48
      %v1745 = vpop.permute.xlu0 %1744
      %1746 = vrot.lane.b32.xlu0 %v1604, 48
      %v1747 = vpop.permute.xlu0 %1746
      %1748 = vrot.lane.b32.xlu0 %v1605, 48
      %v1749 = vpop.permute.xlu0 %1748
      %1750 = vrot.lane.b32.xlu0 %v1606, 48
      %v1751 = vpop.permute.xlu0 %1750
      %1752 = vrot.lane.b32.xlu0 %v1607, 48
      %v1753 = vpop.permute.xlu0 %1752
      %1754 = vrot.lane.b32.xlu0 %v1608, 48
      %v1755 = vpop.permute.xlu0 %1754
      %1756 = vrot.lane.b32.xlu0 %v1609, 48
      %v1757 = vpop.permute.xlu0 %1756
      %1758 = vrot.lane.b32.xlu0 %v1637, 48
      %v1759 = vpop.permute.xlu0 %1758
      %1760 = vrot.lane.b32.xlu0 %v1638, 48
      %v1761 = vpop.permute.xlu0 %1760
      %1762 = vrot.lane.b32.xlu0 %v1666, 48
      %v1763 = vpop.permute.xlu0 %1762
      %1764 = vrot.lane.b32.xlu0 %v1667, 48
      %v1765 = vpop.permute.xlu0 %1764
      %v1782 = vsel %vm1099, %v1594, %v1685
      %v1783 = vsel %vm1099, %v1595, %v1687
      %v1784 = vsel %vm1099, %v1596, %v1689
      %v1785 = vsel %vm1099, %v1597, %v1691
      %v1786 = vsel %vm1099, %v1598, %v1693
      %v1787 = vsel %vm1099, %v1599, %v1695
      %v1788 = vsel %vm1099, %v1600, %v1697
      %v1789 = vsel %vm1099, %v1601, %v1699
      %v1790 = vsel %vm1099, %v1602, %v1701
      %v1791 = vsel %vm1099, %v1603, %v1703
      %v1792 = vsel %vm1099, %v1604, %v1705
      %v1793 = vsel %vm1099, %v1605, %v1707
      %v1794 = vsel %vm1099, %v1606, %v1709
      %v1795 = vsel %vm1099, %v1607, %v1711
      %v1796 = vsel %vm1099, %v1608, %v1713
      %v1797 = vsel %vm1099, %v1609, %v1715
      %vm1798 = vcmask 392192
      %v1799 = vsel %vm1798, %v1782, %v1735
      %v1800 = vsel %vm1798, %v1783, %v1737
      %v1801 = vsel %vm1798, %v1784, %v1739
      %v1802 = vsel %vm1798, %v1785, %v1741
      %v1803 = vsel %vm1798, %v1786, %v1743
      %v1804 = vsel %vm1798, %v1787, %v1745
      %v1805 = vsel %vm1798, %v1788, %v1747
      %v1806 = vsel %vm1798, %v1789, %v1749
      %v1807 = vsel %vm1798, %v1790, %v1751
      %v1808 = vsel %vm1798, %v1791, %v1753
      %v1809 = vsel %vm1798, %v1792, %v1755
      %v1810 = vsel %vm1798, %v1793, %v1757
      %v1811 = vsel %vm1798, %v1794, %v1759
      %v1812 = vsel %vm1798, %v1795, %v1761
      %v1813 = vsel %vm1798, %v1796, %v1763
      %v1814 = vsel %vm1798, %v1797, %v1765
      %v1815 = vld [vmem:[%s5] sm:$0xff]
      %v1816 = vld [vmem:[%s5 + $0x8] sm:$0xff]
      %v1817 = vld [vmem:[%s5 + $0x10] sm:$0xff]
      %v1818 = vld [vmem:[%s5 + $0x18] sm:$0xff]
      %v1819 = vld [vmem:[%s5 + $0x20] sm:$0xff]
      %v1820 = vld [vmem:[%s5 + $0x28] sm:$0xff]
      %v1821 = vld [vmem:[%s5 + $0x30] sm:$0xff]
      %v1822 = vld [vmem:[%s5 + $0x38] sm:$0xff]
      %v1823 = vld [vmem:[%s5 + $0x40] sm:$0xff]
      %v1824 = vld [vmem:[%s6] sm:$0x1]
      %v1826 = vperm.slane %v1824, 0
      %vm1828 = vcmask 588800
      %v1830 = vsel %vm1828, %v1799, 0
      %v1833 = vsel %vm1828, %v1800, 0
      %v1836 = vsel %vm1828, %v1801, 0
      %v1839 = vsel %vm1828, %v1802, 0
      %v1842 = vsel %vm1828, %v1803, 0
      %v1845 = vsel %vm1828, %v1804, 0
      %v1848 = vsel %vm1828, %v1805, 0
      %v1851 = vsel %vm1828, %v1806, 0
      %v1854 = vsel %vm1828, %v1807, 0
      %v1857 = vsel %vm1828, %v1808, 0
      %v1860 = vsel %vm1828, %v1809, 0
      %v1863 = vsel %vm1828, %v1810, 0
      %v1866 = vsel %vm1828, %v1811, 0
      %v1869 = vsel %vm1828, %v1812, 0
      %v1872 = vsel %vm1828, %v1813, 0
      %v1875 = vsel %vm1828, %v1814, 0
      %1877 = vmatpush.msra.mxu0 0.0
      %1878 = vmatpush.msra.mxu0 0.0
      %1879 = vmatpush.msra.mxu0 0.0
      %1880 = vmatpush.msra.mxu0 0.0
      %1881 = vmatpush.msra.mxu0 0.0
      %1882 = vmatpush.msra.mxu0 0.0
      %1883 = vmatpush.msra.mxu0 0.0
      %1884 = vmatpush.msra.mxu0 %v1823
      %1885 = vmatpush.msra.mxu0 %v1822
      %1886 = vmatpush.msra.mxu0 %v1821
      %1887 = vmatpush.msra.mxu0 %v1820
      %1888 = vmatpush.msra.mxu0 %v1819
      %1889 = vmatpush.msra.mxu0 %v1818
      %1890 = vmatpush.msra.mxu0 %v1817
      %1891 = vmatpush.msra.mxu0 %v1816
      %1892 = vmatpush.msra.mxu0 %v1815
      %1893 = vmatmul.f32.gmra.mxu0 %v1830
      %v1894 = vpop.f32.mrf.mxu0
      %v1895 = vadd.f32 %v1826, %v1894
      %1896 = vmatmul.f32.gmra.mxu0 %v1833
      %v1897 = vpop.f32.mrf.mxu0
      %v1898 = vadd.f32 %v1826, %v1897
      %1899 = vmatmul.f32.gmra.mxu0 %v1836
      %v1900 = vpop.f32.mrf.mxu0
      %v1901 = vadd.f32 %v1826, %v1900
      %1902 = vmatmul.f32.gmra.mxu0 %v1839
      %v1903 = vpop.f32.mrf.mxu0
      %v1904 = vadd.f32 %v1826, %v1903
      %1905 = vmatmul.f32.gmra.mxu0 %v1842
      %v1906 = vpop.f32.mrf.mxu0
      %v1907 = vadd.f32 %v1826, %v1906
      %1908 = vmatmul.f32.gmra.mxu0 %v1845
      %v1909 = vpop.f32.mrf.mxu0
      %v1910 = vadd.f32 %v1826, %v1909
      %1911 = vmatmul.f32.gmra.mxu0 %v1848
      %v1912 = vpop.f32.mrf.mxu0
      %v1913 = vadd.f32 %v1826, %v1912
      %1914 = vmatmul.f32.gmra.mxu0 %v1851
      %v1915 = vpop.f32.mrf.mxu0
      %v1916 = vadd.f32 %v1826, %v1915
      %1917 = vmatmul.f32.gmra.mxu0 %v1854
      %v1918 = vpop.f32.mrf.mxu0
      %v1919 = vadd.f32 %v1826, %v1918
      %1920 = vmatmul.f32.gmra.mxu0 %v1857
      %v1921 = vpop.f32.mrf.mxu0
      %v1922 = vadd.f32 %v1826, %v1921
      %1923 = vmatmul.f32.gmra.mxu0 %v1860
      %v1924 = vpop.f32.mrf.mxu0
      %v1925 = vadd.f32 %v1826, %v1924
      %1926 = vmatmul.f32.gmra.mxu0 %v1863
      %v1927 = vpop.f32.mrf.mxu0
      %v1928 = vadd.f32 %v1826, %v1927
      %1929 = vmatmul.f32.gmra.mxu0 %v1866
      %v1930 = vpop.f32.mrf.mxu0
      %v1931 = vadd.f32 %v1826, %v1930
      %1932 = vmatmul.f32.gmra.mxu0 %v1869
      %v1933 = vpop.f32.mrf.mxu0
      %v1934 = vadd.f32 %v1826, %v1933
      %1935 = vmatmul.f32.gmra.mxu0 %v1872
      %v1936 = vpop.f32.mrf.mxu0
      %v1937 = vadd.f32 %v1826, %v1936
      %1938 = vmatmul.f32.gmra.mxu0 %v1875
      %v1939 = vpop.f32.mrf.mxu0
      %v1940 = vadd.f32 %v1826, %v1939
      %1941 = vdwg.mxu0
      %v1942 = vmax.f32 %v1895, 0.0
      %v1943 = vmax.f32 %v1898, 0.0
      %v1944 = vmax.f32 %v1901, 0.0
      %v1945 = vmax.f32 %v1904, 0.0
      %v1946 = vmax.f32 %v1907, 0.0
      %v1947 = vmax.f32 %v1910, 0.0
      %v1948 = vmax.f32 %v1913, 0.0
      %v1949 = vmax.f32 %v1916, 0.0
      %v1950 = vmax.f32 %v1919, 0.0
      %v1951 = vmax.f32 %v1922, 0.0
      %v1952 = vmax.f32 %v1925, 0.0
      %v1953 = vmax.f32 %v1928, 0.0
      %v1954 = vmax.f32 %v1931, 0.0
      %v1955 = vmax.f32 %v1934, 0.0
      %v1956 = vmax.f32 %v1937, 0.0
      %v1957 = vmax.f32 %v1940, 0.0
      %1958 = vst.msk [vmem:[%s455] sm:$0xff] %vm857, %v1942
      %1959 = vst.msk [vmem:[%s455 + $0x8] sm:$0xff] %vm857, %v1943
      %1960 = vst.msk [vmem:[%s455 + $0x10] sm:$0xff] %vm857, %v1944
      %1961 = vst.msk [vmem:[%s455 + $0x18] sm:$0xff] %vm857, %v1945
      %1962 = vst.msk [vmem:[%s455 + $0x20] sm:$0xff] %vm857, %v1946
      %1963 = vst.msk [vmem:[%s455 + $0x28] sm:$0xff] %vm857, %v1947
      %1964 = vst.msk [vmem:[%s455 + $0x30] sm:$0xff] %vm857, %v1948
      %1965 = vst.msk [vmem:[%s455 + $0x38] sm:$0xff] %vm857, %v1949
      %1966 = vst.msk [vmem:[%s455 + $0x40] sm:$0xff] %vm857, %v1950
      %1967 = vst.msk [vmem:[%s455 + $0x48] sm:$0xff] %vm857, %v1951
      %1968 = vst.msk [vmem:[%s455 + $0x50] sm:$0xff] %vm857, %v1952
      %1969 = vst.msk [vmem:[%s455 + $0x58] sm:$0xff] %vm857, %v1953
      %1970 = vst.msk [vmem:[%s455 + $0x60] sm:$0xff] %vm857, %v1954
      %1971 = vst.msk [vmem:[%s455 + $0x68] sm:$0xff] %vm857, %v1955
      %1972 = vst.msk [vmem:[%s455 + $0x70] sm:$0xff] %vm857, %v1956
      %1973 = vst.msk [vmem:[%s455 + $0x78] sm:$0xff] %vm857, %v1957
      %s1974 = smul.u32 8, %s23
      %p1975 = scmp.lt.s32.totalorder %s22, 1
      %s1976 = scalar_select %p1975, %s22, 1
      %p1977 = scmp.lt.s32.totalorder %s1974, 15
      %s1978 = scalar_select %p1977, %s1974, 15
      %s1979 = smul.addr %s1978, 2
      %s1980 = smul.addr %s1976, 32
      %s1981 = sadd.s32 %s1979, %s1980
      %s1982 = smul.addr %s1981, 8
      %s1983 = scalar_lea.vmem %s7, %s1982
      // Predicated region
      $region65: #{double_conv.1} parent=47 // pred_check
        %p1984 = pneg %p234
      $region66: #{double_conv.1} parent=47 // pred_check_branch
        %1986 = sbr.rel (%p1984) target = $region68
      $region67: #{double_conv.1} parent=47 // pred_region
        %s1987 = smul.u32 8, %s23
      $region68: #{double_conv.1} parent=47 // pred_fallthru
        _
    $region48: #{double_conv.1} parent=5 // pred_fallthru
      _
    %p1988 = scmp.le.s32.totalorder 2, %s13
    // Predicated region
    $region69: #{double_conv.1} parent=5 // pred_check
      %p1989 = pneg %p1988
    $region70: #{double_conv.1} parent=5 // pred_check_branch
      %1991 = sbr.rel (%p1989) target = $region72
    $region71: #{double_conv.1} parent=5 // pred_region
      %s1992 = ssub.s32 %s13, 2
      // Predicated region
      $region73: #{double_conv.1} parent=71 // pred_check
        %p1993 = pneg %p240
      $region74: #{double_conv.1} parent=71 // pred_check_branch
        %1995 = sbr.rel (%p1993) target = $region76
      $region75: #{double_conv.1} parent=71 // pred_region
        %s1996 = smul.u32 8, %s25
        %p1997 = scmp.lt.s32.totalorder %s24, 1
        %s1998 = scalar_select %p1997, %s24, 1
        %p1999 = scmp.lt.s32.totalorder %s1996, 15
        %s2000 = scalar_select %p1999, %s1996, 15
        %s2001 = smul.addr %s2000, 2
        %s2002 = smul.addr %s1998, 32
        %s2003 = sadd.s32 %s2001, %s2002
        %s2004 = smul.addr %s2003, 8
        %s2005 = scalar_lea.vmem %s7, %s2004
      $region76: #{double_conv.1} parent=71 // pred_fallthru
        _
    $region72: #{double_conv.1} parent=5 // pred_fallthru
      _
  $region6: #{double_conv.1} parent=0 // loop_footer
    %s17 = sadd.s32 1, %s13
  $region7: #{double_conv.1} parent=0 // loop_footer_branch
    %12 = sbr.rel target = $region3
  $region8: #{double_conv.1} parent=0 // loop_exit
    _

</llo_original>
